<compile_context>
chip_gen: v5e
topology: v5e:2x2
jax: 0.10.0
libtpu: 0.0.40
codegen_flags: <defaults>
</compile_context>

<pallas_src>
import functools

import jax
import jax.numpy as jnp
from jax import lax
from jax.experimental import pallas as pl
from jax.experimental.pallas import tpu as pltpu


HID_S = 128          # selector hidden width (100 padded to 128)
HID_P = 256          # predictor hidden width (200 padded to 256)
_NEG_LOGIT = -1e9    # logit bias for padded feature columns -> softmax weight is exactly 0


def _round_up(n, m):
    return (n + m - 1) // m * m


def _pad_to(a, shape, fill=0.0):
    pads = [(0, t - s) for s, t in zip(a.shape, shape)]
    return jnp.pad(a, pads, constant_values=fill)


def _mix32(x):
    """lowbias32 integer mixer — plain 32-bit uint ops, portable to Mosaic & interpret."""
    x = x ^ (x >> 16)
    x = x * jnp.uint32(0x7FEB352D)
    x = x ^ (x >> 15)
    x = x * jnp.uint32(0x846CA68B)
    x = x ^ (x >> 16)
    return x


def _l2x_kernel(k, tb, dp,
                seed_ref, itau_ref,                                   # scalar prefetch (SMEM)
                x_ref,
                w_s1_ref, b_s1_ref, w_s2_ref, b_s2_ref, w_log_ref, b_log_ref,
                w_d1_ref, b_d1_ref, w_d2_ref, b_d2_ref, w_p_ref, b_p_ref,
                preds_ref, samples_ref):
    xb = x_ref[...]                                                    # (TB, Dp) bf16

    # ---- selector MLP: Linear->ReLU, Linear->ReLU, Linear (logits) ----
    # bf16 MXU operands, f32 accumulation; biases added in f32.
    h = jnp.dot(xb, w_s1_ref[...], preferred_element_type=jnp.float32) + b_s1_ref[...]
    h = jnp.maximum(h, 0.0)                                            # (TB, 128)
    h = jnp.dot(h.astype(jnp.bfloat16), w_s2_ref[...],
                preferred_element_type=jnp.float32) + b_s2_ref[...]
    h = jnp.maximum(h, 0.0)                                            # (TB, 128)
    logits = jnp.dot(h.astype(jnp.bfloat16), w_log_ref[...],
                     preferred_element_type=jnp.float32) + b_log_ref[...]  # (TB, Dp)

    # ---- SampleConcrete (Gumbel-softmax), training=True path ----
    inv_tau = itau_ref[0]
    scaled_logits = logits * inv_tau                                   # hoisted out of k-loop

    # Portable counter-based RNG: a unique 32-bit counter per (row, sample, feature)
    # element of the virtual (B, k, D) noise tensor, mixed with the seed and run
    # through lowbias32, then mapped to a uniform in [0, 1).
    tile = pl.program_id(0)
    row = lax.broadcasted_iota(jnp.int32, (tb, dp), 0)
    col = lax.broadcasted_iota(jnp.int32, (tb, dp), 1)
    base = (tile * tb + row) * (k * dp) + col                          # int32 element counter
    seed_mix = seed_ref[0].astype(jnp.uint32) * jnp.uint32(0x5BD1E995)

    def one_sample(i, acc):
        ctr = (base + i * dp).astype(jnp.uint32)
        bits = _mix32(ctr ^ seed_mix)
        u = (bits >> 8).astype(jnp.int32).astype(jnp.float32) * jnp.float32(2.0 ** -24)
        u = jnp.maximum(u, 1e-10)                                      # torch .clamp_min(1e-10)
        gumbel = -jnp.log(-jnp.log(u))                                 # (TB, Dp)
        noisy = scaled_logits + gumbel * inv_tau
        m = jnp.max(noisy, axis=-1, keepdims=True)
        e = jnp.exp(noisy - m)
        sm = e / jnp.sum(e, axis=-1, keepdims=True)                    # exact softmax
        return jnp.maximum(acc, sm)                                    # running max over samples

    samples = lax.fori_loop(0, k, one_sample,
                            jnp.zeros((tb, dp), jnp.float32), unroll=True)
    samples_ref[...] = samples                                         # padded feature cols are 0

    # ---- predictor MLP on the masked input ----
    new_in = (xb.astype(jnp.float32) * samples).astype(jnp.bfloat16)   # (TB, Dp)
    g = jnp.dot(new_in, w_d1_ref[...], preferred_element_type=jnp.float32) + b_d1_ref[...]
    g = jnp.maximum(g, 0.0)                                            # (TB, 256)
    g = jnp.dot(g.astype(jnp.bfloat16), w_d2_ref[...],
                preferred_element_type=jnp.float32) + b_d2_ref[...]
    g = jnp.maximum(g, 0.0)                                            # (TB, 256)
    # Linear(200 -> 1): one useful output column -> VPU multiply + lane reduction
    # instead of a 128-wide MXU matmul + 128-wide f32 output slab.
    preds_ref[...] = jnp.sum(g * w_p_ref[...], axis=-1, keepdims=True) + b_p_ref[...]


def l2x_forward(x, params, tau, seed, *, k, batch_tile=None):
    """Full L2X forward pass (training=True) as one pipelined Pallas kernel.

    x:      (B, D) float array
    params: dict of (in, out)-layout Linear weights/biases (see init_params)
    tau:    Gumbel-softmax temperature (runtime scalar; no recompile when it changes)
    seed:   int PRNG seed for the in-kernel Gumbel noise
    k:      number of Concrete samples (num_feature_imp)
    returns (preds (B, 1) f32, samples (B, D) f32)
    """
    B, D = x.shape
    Dp = _round_up(max(D, 128), 128)

    if batch_tile is None:
        b8 = _round_up(B, 8)
        # VMEM bytes per batch row: bf16 x + f32 samples (double-buffered) + f32 temporaries.
        per_row = 52 * Dp
        tb_vmem = max(8, ((24 << 20) // per_row) // 8 * 8)
        # >= 2 grid steps when possible so v7x's 2 TensorCores both get work.
        tb_split = _round_up(max(1, -(-B // 2)), 8)
        batch_tile = max(8, min(256, b8, tb_vmem, tb_split))
    TB = batch_tile
    Bp = _round_up(B, TB)
    n_tiles = Bp // TB

    # ---- pad / cast operands (weights bf16 for MXU, biases f32, x streamed in bf16) ----
    x_p = _pad_to(x.astype(jnp.float32), (Bp, Dp)).astype(jnp.bfloat16)

    f32 = jnp.float32
    w_s1 = _pad_to(params["w_s1"], (Dp, HID_S)).astype(jnp.bfloat16)
    b_s1 = _pad_to(params["b_s1"].astype(f32), (1, HID_S))
    w_s2 = _pad_to(params["w_s2"], (HID_S, HID_S)).astype(jnp.bfloat16)
    b_s2 = _pad_to(params["b_s2"].astype(f32), (1, HID_S))
    w_log = _pad_to(params["w_log"], (HID_S, Dp)).astype(jnp.bfloat16)
    b_log = _pad_to(params["b_log"].astype(f32), (1, Dp), fill=_NEG_LOGIT)
    w_d1 = _pad_to(params["w_d1"], (Dp, HID_P)).astype(jnp.bfloat16)
    b_d1 = _pad_to(params["b_d1"].astype(f32), (1, HID_P))
    w_d2 = _pad_to(params["w_d2"], (HID_P, HID_P)).astype(jnp.bfloat16)
    b_d2 = _pad_to(params["b_d2"].astype(f32), (1, HID_P))
    w_p = _pad_to(params["w_p"].astype(f32).T, (1, HID_P))             # (1, 256) f32 row
    b_p = params["b_p"].astype(f32).reshape(1, 1)

    tile_map = lambda b, *_: (b, 0)     # batch-tiled arrays (index_maps also get prefetch refs)
    res_map = lambda b, *_: (0, 0)      # weights/biases: same block every step -> stay resident

    in_specs = [
        pl.BlockSpec((TB, Dp), tile_map),                                        # x (bf16)
        pl.BlockSpec((Dp, HID_S), res_map), pl.BlockSpec((1, HID_S), res_map),   # w_s1, b_s1
        pl.BlockSpec((HID_S, HID_S), res_map), pl.BlockSpec((1, HID_S), res_map),
        pl.BlockSpec((HID_S, Dp), res_map), pl.BlockSpec((1, Dp), res_map),
        pl.BlockSpec((Dp, HID_P), res_map), pl.BlockSpec((1, HID_P), res_map),
        pl.BlockSpec((HID_P, HID_P), res_map), pl.BlockSpec((1, HID_P), res_map),
        pl.BlockSpec((1, HID_P), res_map), pl.BlockSpec((1, 1), res_map),        # w_p, b_p
    ]
    out_specs = [
        pl.BlockSpec((TB, 1), tile_map),     # preds column (true (B, 1) output)
        pl.BlockSpec((TB, Dp), tile_map),    # samples (lane-dense; sliced to (B, D) below)
    ]

    weights = (w_s1, b_s1, w_s2, b_s2, w_log, b_log, w_d1, b_d1, w_d2, b_d2, w_p, b_p)
    weight_bytes = sum(int(a.size) * a.dtype.itemsize for a in weights)

    # Explicit VMEM budget (double-buffered I/O tiles + resident weights + f32 temporaries).
    est_vmem = (2 * TB * Dp * 2            # x tile (bf16), double-buffered
                + 2 * TB * Dp * 4          # samples tile (f32), double-buffered
                + 2 * TB * 128 * 4         # preds tile (lane-padded), double-buffered
                + 2 * weight_bytes         # resident weights/biases (default double-buffering)
                + 10 * TB * Dp * 4         # Gumbel-softmax live set / logits temporaries
                + 6 * TB * HID_P * 4)      # hidden activations
    vmem_limit = max(32 << 20, min(int(est_vmem * 1.3) + (4 << 20), 64 << 20))

    flops = 2 * Bp * (Dp * HID_S + HID_S * HID_S + HID_S * Dp
                      + Dp * HID_P + HID_P * HID_P + HID_P)
    bytes_accessed = Bp * Dp * 2 + Bp * Dp * 4 + Bp * 4 + weight_bytes
    cost = pl.CostEstimate(flops=int(flops),
                           transcendentals=int(Bp * k * Dp * 3),
                           bytes_accessed=int(bytes_accessed))

    seed_arr = jnp.asarray([seed], dtype=jnp.int32)
    itau_arr = jnp.asarray([1.0 / tau], dtype=jnp.float32)

    preds_p, samples_p = pl.pallas_call(
        functools.partial(_l2x_kernel, k, TB, Dp),
        out_shape=(
            jax.ShapeDtypeStruct((Bp, 1), jnp.float32),
            jax.ShapeDtypeStruct((Bp, Dp), jnp.float32),
        ),
        grid_spec=pltpu.PrefetchScalarGridSpec(
            num_scalar_prefetch=2,
            grid=(n_tiles,),
            in_specs=in_specs,
            out_specs=out_specs,
        ),
        compiler_params=pltpu.CompilerParams(
            dimension_semantics=("parallel",),
            vmem_limit_bytes=vmem_limit,
        ),
        cost_estimate=cost,
    )(seed_arr, itau_arr, x_p,
      w_s1, b_s1, w_s2, b_s2, w_log, b_log,
      w_d1, b_d1, w_d2, b_d2, w_p, b_p)

    return preds_p[:B, :1], samples_p[:B, :D]
    # TODO(synk): the eval (training=False) branch of SampleConcrete (data-dependent
    # top-k thresholding of the logits) is not implemented in-kernel; only the
    # training path of the module's forward is.


def init_params(key, input_dim):
    """Deterministic synthetic weights matching L2XModel's nn.Linear shapes,
    stored as (in_features, out_features)."""
    ks = jax.random.split(key, 12)

    def lin(kw, kb, fan_in, fan_out):
        bound = 1.0 / jnp.sqrt(jnp.float32(fan_in))
        w = jax.random.uniform(kw, (fan_in, fan_out), jnp.float32, -bound, bound)
        b = jax.random.uniform(kb, (1, fan_out), jnp.float32, -bound, bound)
        return w, b

    p = {}
    p["w_s1"], p["b_s1"] = lin(ks[0], ks[1], input_dim, 100)
    p["w_s2"], p["b_s2"] = lin(ks[2], ks[3], 100, 100)
    p["w_log"], p["b_log"] = lin(ks[4], ks[5], 100, input_dim)
    p["w_d1"], p["b_d1"] = lin(ks[6], ks[7], input_dim, 200)
    p["w_d2"], p["b_d2"] = lin(ks[8], ks[9], 200, 200)
    p["w_p"], p["b_p"] = lin(ks[10], ks[11], 200, 1)
    return p


if __name__ == "__main__":
    B = 8            # batch
    D = 16           # input_shape (number of features)
    K = 4            # num_feature_imp
    TAU = 0.1

    root = jax.random.PRNGKey(0)
    k_x, k_p = jax.random.split(root, 2)

    x = jax.random.normal(k_x, (B, D), dtype=jnp.float32)
    params = init_params(k_p, D)

    preds, samples = l2x_forward(x, params, TAU, seed=0, k=K)
    jax.block_until_ready((preds, samples))

    assert preds.shape == (B, 1) and samples.shape == (B, D)
    assert bool(jnp.all(jnp.isfinite(preds))) and bool(jnp.all(jnp.isfinite(samples)))
    assert bool(jnp.all(samples >= 0.0)) and bool(jnp.all(samples <= 1.0 + 1e-3))
    row_sums = jnp.sum(samples, axis=-1)
    assert bool(jnp.all(row_sums <= jnp.float32(K) + 1e-3))   # max of K softmaxes
    print("KERNEL_OK")
</pallas_src>

<mosaic_0001>
module attributes {stable_mosaic.version = 11 : i64} {
  func.func @_l2x_kernel(%arg0: i32, %arg1: memref<1xi32, #tpu.memory_space<smem>>, %arg2: memref<1xf32, #tpu.memory_space<smem>>, %arg3: memref<8x128xbf16, #tpu.memory_space<vmem>>, %arg4: memref<128x128xbf16, #tpu.memory_space<vmem>>, %arg5: memref<1x128xf32, #tpu.memory_space<vmem>>, %arg6: memref<128x128xbf16, #tpu.memory_space<vmem>>, %arg7: memref<1x128xf32, #tpu.memory_space<vmem>>, %arg8: memref<128x128xbf16, #tpu.memory_space<vmem>>, %arg9: memref<1x128xf32, #tpu.memory_space<vmem>>, %arg10: memref<128x256xbf16, #tpu.memory_space<vmem>>, %arg11: memref<1x256xf32, #tpu.memory_space<vmem>>, %arg12: memref<256x256xbf16, #tpu.memory_space<vmem>>, %arg13: memref<1x256xf32, #tpu.memory_space<vmem>>, %arg14: memref<1x256xf32, #tpu.memory_space<vmem>>, %arg15: memref<1x1xf32, #tpu.memory_space<vmem>>, %arg16: memref<8x1xf32, #tpu.memory_space<vmem>>, %arg17: memref<8x128xf32, #tpu.memory_space<vmem>>) attributes {dimension_semantics = [#tpu.dimension_semantics<parallel>], iteration_bounds = array<i64: 1>, scalar_prefetch = 2 : i64, scratch_operands = 0 : i64, tpu.core_type = #tpu.core_type<tc>, window_params = [{transform_indices = @transform_0, window_bounds = array<i64: 8, 128>}, {pipeline_mode = #tpu.pipeline_mode<synchronous>, transform_indices = @transform_1, window_bounds = array<i64: 128, 128>}, {pipeline_mode = #tpu.pipeline_mode<synchronous>, transform_indices = @transform_2, window_bounds = array<i64: 1, 128>}, {pipeline_mode = #tpu.pipeline_mode<synchronous>, transform_indices = @transform_3, window_bounds = array<i64: 128, 128>}, {pipeline_mode = #tpu.pipeline_mode<synchronous>, transform_indices = @transform_4, window_bounds = array<i64: 1, 128>}, {pipeline_mode = #tpu.pipeline_mode<synchronous>, transform_indices = @transform_5, window_bounds = array<i64: 128, 128>}, {pipeline_mode = #tpu.pipeline_mode<synchronous>, transform_indices = @transform_6, window_bounds = array<i64: 1, 128>}, {pipeline_mode = #tpu.pipeline_mode<synchronous>, transform_indices = @transform_7, window_bounds = array<i64: 128, 256>}, {pipeline_mode = #tpu.pipeline_mode<synchronous>, transform_indices = @transform_8, window_bounds = array<i64: 1, 256>}, {pipeline_mode = #tpu.pipeline_mode<synchronous>, transform_indices = @transform_9, window_bounds = array<i64: 256, 256>}, {pipeline_mode = #tpu.pipeline_mode<synchronous>, transform_indices = @transform_10, window_bounds = array<i64: 1, 256>}, {pipeline_mode = #tpu.pipeline_mode<synchronous>, transform_indices = @transform_11, window_bounds = array<i64: 1, 256>}, {pipeline_mode = #tpu.pipeline_mode<synchronous>, transform_indices = @transform_12, window_bounds = array<i64: 1, 1>}, {transform_indices = @transform_13, window_bounds = array<i64: 8, 1>}, {transform_indices = @transform_14, window_bounds = array<i64: 8, 128>}]} {
    %c0 = arith.constant 0 : index
    %c0_0 = arith.constant 0 : index
    %0 = vector.load %arg3[%c0, %c0_0] : memref<8x128xbf16, #tpu.memory_space<vmem>>, vector<8x128xbf16>
    %c0_1 = arith.constant 0 : index
    %c0_2 = arith.constant 0 : index
    %1 = vector.load %arg4[%c0_1, %c0_2] : memref<128x128xbf16, #tpu.memory_space<vmem>>, vector<128x128xbf16>
    %cst = arith.constant dense<0.000000e+00> : vector<8x128xf32>
    %2 = tpu.matmul %0, %1, %cst {dimension_numbers = #tpu.dot_dimension_numbers<[1], [0], [0], [1], [0, 0, 1, 1], [], []>} : vector<8x128xbf16>, vector<128x128xbf16>, vector<8x128xf32> -> vector<8x128xf32>
    %c0_3 = arith.constant 0 : index
    %c0_4 = arith.constant 0 : index
    %3 = vector.load %arg5[%c0_3, %c0_4] : memref<1x128xf32, #tpu.memory_space<vmem>>, vector<1x128xf32>
    %4 = vector.broadcast %3 : vector<1x128xf32> to vector<8x128xf32>
    %5 = arith.addf %2, %4 : vector<8x128xf32>
    %cst_5 = arith.constant 0.000000e+00 : f32
    %6 = vector.broadcast %cst_5 : f32 to vector<8x128xf32>
    %7 = arith.maximumf %5, %6 : vector<8x128xf32>
    %8 = arith.truncf %7 : vector<8x128xf32> to vector<8x128xbf16>
    %c0_6 = arith.constant 0 : index
    %c0_7 = arith.constant 0 : index
    %9 = vector.load %arg6[%c0_6, %c0_7] : memref<128x128xbf16, #tpu.memory_space<vmem>>, vector<128x128xbf16>
    %cst_8 = arith.constant dense<0.000000e+00> : vector<8x128xf32>
    %10 = tpu.matmul %8, %9, %cst_8 {dimension_numbers = #tpu.dot_dimension_numbers<[1], [0], [0], [1], [0, 0, 1, 1], [], []>} : vector<8x128xbf16>, vector<128x128xbf16>, vector<8x128xf32> -> vector<8x128xf32>
    %c0_9 = arith.constant 0 : index
    %c0_10 = arith.constant 0 : index
    %11 = vector.load %arg7[%c0_9, %c0_10] : memref<1x128xf32, #tpu.memory_space<vmem>>, vector<1x128xf32>
    %12 = vector.broadcast %11 : vector<1x128xf32> to vector<8x128xf32>
    %13 = arith.addf %10, %12 : vector<8x128xf32>
    %cst_11 = arith.constant 0.000000e+00 : f32
    %14 = vector.broadcast %cst_11 : f32 to vector<8x128xf32>
    %15 = arith.maximumf %13, %14 : vector<8x128xf32>
    %16 = arith.truncf %15 : vector<8x128xf32> to vector<8x128xbf16>
    %c0_12 = arith.constant 0 : index
    %c0_13 = arith.constant 0 : index
    %17 = vector.load %arg8[%c0_12, %c0_13] : memref<128x128xbf16, #tpu.memory_space<vmem>>, vector<128x128xbf16>
    %cst_14 = arith.constant dense<0.000000e+00> : vector<8x128xf32>
    %18 = tpu.matmul %16, %17, %cst_14 {dimension_numbers = #tpu.dot_dimension_numbers<[1], [0], [0], [1], [0, 0, 1, 1], [], []>} : vector<8x128xbf16>, vector<128x128xbf16>, vector<8x128xf32> -> vector<8x128xf32>
    %c0_15 = arith.constant 0 : index
    %c0_16 = arith.constant 0 : index
    %19 = vector.load %arg9[%c0_15, %c0_16] : memref<1x128xf32, #tpu.memory_space<vmem>>, vector<1x128xf32>
    %20 = vector.broadcast %19 : vector<1x128xf32> to vector<8x128xf32>
    %21 = arith.addf %18, %20 : vector<8x128xf32>
    %c0_17 = arith.constant 0 : index
    %22 = memref.load %arg2[%c0_17] : memref<1xf32, #tpu.memory_space<smem>>
    %23 = vector.broadcast %22 : f32 to vector<8x128xf32>
    %24 = arith.mulf %21, %23 : vector<8x128xf32>
    %25 = tpu.iota {dimensions = array<i32: 0>} : vector<8x128xi32>
    %26 = tpu.iota {dimensions = array<i32: 1>} : vector<8x128xi32>
    %c8_i32 = arith.constant 8 : i32
    %27 = arith.muli %arg0, %c8_i32 : i32
    %28 = vector.broadcast %27 : i32 to vector<8x128xi32>
    %29 = arith.addi %28, %25 : vector<8x128xi32>
    %c512_i32 = arith.constant 512 : i32
    %30 = vector.broadcast %c512_i32 : i32 to vector<8x128xi32>
    %31 = arith.muli %29, %30 : vector<8x128xi32>
    %32 = arith.addi %31, %26 : vector<8x128xi32>
    %c0_18 = arith.constant 0 : index
    %33 = memref.load %arg1[%c0_18] : memref<1xi32, #tpu.memory_space<smem>>
    %c1540483477_i32 = arith.constant 1540483477 : i32
    %34 = arith.muli %33, %c1540483477_i32 : i32
    %cst_19 = arith.constant 0.000000e+00 : f32
    %35 = vector.broadcast %cst_19 : f32 to vector<8x128xf32>
    %c0_i32 = arith.constant 0 : i32
    %c128_i32 = arith.constant 128 : i32
    %36 = arith.muli %c0_i32, %c128_i32 : i32
    %37 = vector.broadcast %36 : i32 to vector<8x128xi32>
    %38 = arith.addi %32, %37 : vector<8x128xi32>
    %39 = vector.broadcast %34 : i32 to vector<8x128xi32>
    %40 = arith.xori %38, %39 : vector<8x128xi32>
    %c16_i32 = arith.constant 16 : i32
    %41 = vector.broadcast %c16_i32 : i32 to vector<8x128xi32>
    %42 = arith.shrui %40, %41 : vector<8x128xi32>
    %43 = arith.xori %40, %42 : vector<8x128xi32>
    %c2146121005_i32 = arith.constant 2146121005 : i32
    %44 = vector.broadcast %c2146121005_i32 : i32 to vector<8x128xi32>
    %45 = arith.muli %43, %44 : vector<8x128xi32>
    %c15_i32 = arith.constant 15 : i32
    %46 = vector.broadcast %c15_i32 : i32 to vector<8x128xi32>
    %47 = arith.shrui %45, %46 : vector<8x128xi32>
    %48 = arith.xori %45, %47 : vector<8x128xi32>
    %c-2073254261_i32 = arith.constant -2073254261 : i32
    %49 = vector.broadcast %c-2073254261_i32 : i32 to vector<8x128xi32>
    %50 = arith.muli %48, %49 : vector<8x128xi32>
    %c16_i32_20 = arith.constant 16 : i32
    %51 = vector.broadcast %c16_i32_20 : i32 to vector<8x128xi32>
    %52 = arith.shrui %50, %51 : vector<8x128xi32>
    %53 = arith.xori %50, %52 : vector<8x128xi32>
    %c8_i32_21 = arith.constant 8 : i32
    %54 = vector.broadcast %c8_i32_21 : i32 to vector<8x128xi32>
    %55 = arith.shrui %53, %54 : vector<8x128xi32>
    %56 = arith.sitofp %55 : vector<8x128xi32> to vector<8x128xf32>
    %cst_22 = arith.constant 5.96046448E-8 : f32
    %57 = vector.broadcast %cst_22 : f32 to vector<8x128xf32>
    %58 = arith.mulf %56, %57 : vector<8x128xf32>
    %cst_23 = arith.constant 1.000000e-10 : f32
    %59 = vector.broadcast %cst_23 : f32 to vector<8x128xf32>
    %60 = arith.maximumf %58, %59 : vector<8x128xf32>
    %61 = math.log %60 : vector<8x128xf32>
    %cst_24 = arith.constant 0.000000e+00 : f32
    %62 = vector.broadcast %cst_24 : f32 to vector<8x128xf32>
    %63 = arith.subf %62, %61 : vector<8x128xf32>
    %64 = math.log %63 : vector<8x128xf32>
    %cst_25 = arith.constant 0.000000e+00 : f32
    %65 = vector.broadcast %cst_25 : f32 to vector<8x128xf32>
    %66 = arith.subf %65, %64 : vector<8x128xf32>
    %67 = vector.broadcast %22 : f32 to vector<8x128xf32>
    %68 = arith.mulf %66, %67 : vector<8x128xf32>
    %69 = arith.addf %24, %68 : vector<8x128xf32>
    %cst_26 = arith.constant dense<0xFF800000> : vector<8xf32>
    %70 = vector.multi_reduction <maximumf>, %69, %cst_26 [1] : vector<8x128xf32> to vector<8xf32>
    %71 = vector.shape_cast %70 : vector<8xf32> to vector<8x1xf32>
    %72 = vector.broadcast %71 : vector<8x1xf32> to vector<8x128xf32>
    %73 = arith.subf %69, %72 : vector<8x128xf32>
    %74 = math.exp %73 : vector<8x128xf32>
    %cst_27 = arith.constant dense<0.000000e+00> : vector<8xf32>
    %75 = vector.multi_reduction <add>, %74, %cst_27 [1] : vector<8x128xf32> to vector<8xf32>
    %76 = vector.shape_cast %75 : vector<8xf32> to vector<8x1xf32>
    %77 = vector.broadcast %76 : vector<8x1xf32> to vector<8x128xf32>
    %78 = arith.divf %74, %77 : vector<8x128xf32>
    %79 = arith.maximumf %35, %78 : vector<8x128xf32>
    %c1_i32 = arith.constant 1 : i32
    %c128_i32_28 = arith.constant 128 : i32
    %80 = arith.muli %c1_i32, %c128_i32_28 : i32
    %81 = vector.broadcast %80 : i32 to vector<8x128xi32>
    %82 = arith.addi %32, %81 : vector<8x128xi32>
    %83 = vector.broadcast %34 : i32 to vector<8x128xi32>
    %84 = arith.xori %82, %83 : vector<8x128xi32>
    %c16_i32_29 = arith.constant 16 : i32
    %85 = vector.broadcast %c16_i32_29 : i32 to vector<8x128xi32>
    %86 = arith.shrui %84, %85 : vector<8x128xi32>
    %87 = arith.xori %84, %86 : vector<8x128xi32>
    %c2146121005_i32_30 = arith.constant 2146121005 : i32
    %88 = vector.broadcast %c2146121005_i32_30 : i32 to vector<8x128xi32>
    %89 = arith.muli %87, %88 : vector<8x128xi32>
    %c15_i32_31 = arith.constant 15 : i32
    %90 = vector.broadcast %c15_i32_31 : i32 to vector<8x128xi32>
    %91 = arith.shrui %89, %90 : vector<8x128xi32>
    %92 = arith.xori %89, %91 : vector<8x128xi32>
    %c-2073254261_i32_32 = arith.constant -2073254261 : i32
    %93 = vector.broadcast %c-2073254261_i32_32 : i32 to vector<8x128xi32>
    %94 = arith.muli %92, %93 : vector<8x128xi32>
    %c16_i32_33 = arith.constant 16 : i32
    %95 = vector.broadcast %c16_i32_33 : i32 to vector<8x128xi32>
    %96 = arith.shrui %94, %95 : vector<8x128xi32>
    %97 = arith.xori %94, %96 : vector<8x128xi32>
    %c8_i32_34 = arith.constant 8 : i32
    %98 = vector.broadcast %c8_i32_34 : i32 to vector<8x128xi32>
    %99 = arith.shrui %97, %98 : vector<8x128xi32>
    %100 = arith.sitofp %99 : vector<8x128xi32> to vector<8x128xf32>
    %cst_35 = arith.constant 5.96046448E-8 : f32
    %101 = vector.broadcast %cst_35 : f32 to vector<8x128xf32>
    %102 = arith.mulf %100, %101 : vector<8x128xf32>
    %cst_36 = arith.constant 1.000000e-10 : f32
    %103 = vector.broadcast %cst_36 : f32 to vector<8x128xf32>
    %104 = arith.maximumf %102, %103 : vector<8x128xf32>
    %105 = math.log %104 : vector<8x128xf32>
    %cst_37 = arith.constant 0.000000e+00 : f32
    %106 = vector.broadcast %cst_37 : f32 to vector<8x128xf32>
    %107 = arith.subf %106, %105 : vector<8x128xf32>
    %108 = math.log %107 : vector<8x128xf32>
    %cst_38 = arith.constant 0.000000e+00 : f32
    %109 = vector.broadcast %cst_38 : f32 to vector<8x128xf32>
    %110 = arith.subf %109, %108 : vector<8x128xf32>
    %111 = vector.broadcast %22 : f32 to vector<8x128xf32>
    %112 = arith.mulf %110, %111 : vector<8x128xf32>
    %113 = arith.addf %24, %112 : vector<8x128xf32>
    %cst_39 = arith.constant dense<0xFF800000> : vector<8xf32>
    %114 = vector.multi_reduction <maximumf>, %113, %cst_39 [1] : vector<8x128xf32> to vector<8xf32>
    %115 = vector.shape_cast %114 : vector<8xf32> to vector<8x1xf32>
    %116 = vector.broadcast %115 : vector<8x1xf32> to vector<8x128xf32>
    %117 = arith.subf %113, %116 : vector<8x128xf32>
    %118 = math.exp %117 : vector<8x128xf32>
    %cst_40 = arith.constant dense<0.000000e+00> : vector<8xf32>
    %119 = vector.multi_reduction <add>, %118, %cst_40 [1] : vector<8x128xf32> to vector<8xf32>
    %120 = vector.shape_cast %119 : vector<8xf32> to vector<8x1xf32>
    %121 = vector.broadcast %120 : vector<8x1xf32> to vector<8x128xf32>
    %122 = arith.divf %118, %121 : vector<8x128xf32>
    %123 = arith.maximumf %79, %122 : vector<8x128xf32>
    %c2_i32 = arith.constant 2 : i32
    %c128_i32_41 = arith.constant 128 : i32
    %124 = arith.muli %c2_i32, %c128_i32_41 : i32
    %125 = vector.broadcast %124 : i32 to vector<8x128xi32>
    %126 = arith.addi %32, %125 : vector<8x128xi32>
    %127 = vector.broadcast %34 : i32 to vector<8x128xi32>
    %128 = arith.xori %126, %127 : vector<8x128xi32>
    %c16_i32_42 = arith.constant 16 : i32
    %129 = vector.broadcast %c16_i32_42 : i32 to vector<8x128xi32>
    %130 = arith.shrui %128, %129 : vector<8x128xi32>
    %131 = arith.xori %128, %130 : vector<8x128xi32>
    %c2146121005_i32_43 = arith.constant 2146121005 : i32
    %132 = vector.broadcast %c2146121005_i32_43 : i32 to vector<8x128xi32>
    %133 = arith.muli %131, %132 : vector<8x128xi32>
    %c15_i32_44 = arith.constant 15 : i32
    %134 = vector.broadcast %c15_i32_44 : i32 to vector<8x128xi32>
    %135 = arith.shrui %133, %134 : vector<8x128xi32>
    %136 = arith.xori %133, %135 : vector<8x128xi32>
    %c-2073254261_i32_45 = arith.constant -2073254261 : i32
    %137 = vector.broadcast %c-2073254261_i32_45 : i32 to vector<8x128xi32>
    %138 = arith.muli %136, %137 : vector<8x128xi32>
    %c16_i32_46 = arith.constant 16 : i32
    %139 = vector.broadcast %c16_i32_46 : i32 to vector<8x128xi32>
    %140 = arith.shrui %138, %139 : vector<8x128xi32>
    %141 = arith.xori %138, %140 : vector<8x128xi32>
    %c8_i32_47 = arith.constant 8 : i32
    %142 = vector.broadcast %c8_i32_47 : i32 to vector<8x128xi32>
    %143 = arith.shrui %141, %142 : vector<8x128xi32>
    %144 = arith.sitofp %143 : vector<8x128xi32> to vector<8x128xf32>
    %cst_48 = arith.constant 5.96046448E-8 : f32
    %145 = vector.broadcast %cst_48 : f32 to vector<8x128xf32>
    %146 = arith.mulf %144, %145 : vector<8x128xf32>
    %cst_49 = arith.constant 1.000000e-10 : f32
    %147 = vector.broadcast %cst_49 : f32 to vector<8x128xf32>
    %148 = arith.maximumf %146, %147 : vector<8x128xf32>
    %149 = math.log %148 : vector<8x128xf32>
    %cst_50 = arith.constant 0.000000e+00 : f32
    %150 = vector.broadcast %cst_50 : f32 to vector<8x128xf32>
    %151 = arith.subf %150, %149 : vector<8x128xf32>
    %152 = math.log %151 : vector<8x128xf32>
    %cst_51 = arith.constant 0.000000e+00 : f32
    %153 = vector.broadcast %cst_51 : f32 to vector<8x128xf32>
    %154 = arith.subf %153, %152 : vector<8x128xf32>
    %155 = vector.broadcast %22 : f32 to vector<8x128xf32>
    %156 = arith.mulf %154, %155 : vector<8x128xf32>
    %157 = arith.addf %24, %156 : vector<8x128xf32>
    %cst_52 = arith.constant dense<0xFF800000> : vector<8xf32>
    %158 = vector.multi_reduction <maximumf>, %157, %cst_52 [1] : vector<8x128xf32> to vector<8xf32>
    %159 = vector.shape_cast %158 : vector<8xf32> to vector<8x1xf32>
    %160 = vector.broadcast %159 : vector<8x1xf32> to vector<8x128xf32>
    %161 = arith.subf %157, %160 : vector<8x128xf32>
    %162 = math.exp %161 : vector<8x128xf32>
    %cst_53 = arith.constant dense<0.000000e+00> : vector<8xf32>
    %163 = vector.multi_reduction <add>, %162, %cst_53 [1] : vector<8x128xf32> to vector<8xf32>
    %164 = vector.shape_cast %163 : vector<8xf32> to vector<8x1xf32>
    %165 = vector.broadcast %164 : vector<8x1xf32> to vector<8x128xf32>
    %166 = arith.divf %162, %165 : vector<8x128xf32>
    %167 = arith.maximumf %123, %166 : vector<8x128xf32>
    %c3_i32 = arith.constant 3 : i32
    %c128_i32_54 = arith.constant 128 : i32
    %168 = arith.muli %c3_i32, %c128_i32_54 : i32
    %169 = vector.broadcast %168 : i32 to vector<8x128xi32>
    %170 = arith.addi %32, %169 : vector<8x128xi32>
    %171 = vector.broadcast %34 : i32 to vector<8x128xi32>
    %172 = arith.xori %170, %171 : vector<8x128xi32>
    %c16_i32_55 = arith.constant 16 : i32
    %173 = vector.broadcast %c16_i32_55 : i32 to vector<8x128xi32>
    %174 = arith.shrui %172, %173 : vector<8x128xi32>
    %175 = arith.xori %172, %174 : vector<8x128xi32>
    %c2146121005_i32_56 = arith.constant 2146121005 : i32
    %176 = vector.broadcast %c2146121005_i32_56 : i32 to vector<8x128xi32>
    %177 = arith.muli %175, %176 : vector<8x128xi32>
    %c15_i32_57 = arith.constant 15 : i32
    %178 = vector.broadcast %c15_i32_57 : i32 to vector<8x128xi32>
    %179 = arith.shrui %177, %178 : vector<8x128xi32>
    %180 = arith.xori %177, %179 : vector<8x128xi32>
    %c-2073254261_i32_58 = arith.constant -2073254261 : i32
    %181 = vector.broadcast %c-2073254261_i32_58 : i32 to vector<8x128xi32>
    %182 = arith.muli %180, %181 : vector<8x128xi32>
    %c16_i32_59 = arith.constant 16 : i32
    %183 = vector.broadcast %c16_i32_59 : i32 to vector<8x128xi32>
    %184 = arith.shrui %182, %183 : vector<8x128xi32>
    %185 = arith.xori %182, %184 : vector<8x128xi32>
    %c8_i32_60 = arith.constant 8 : i32
    %186 = vector.broadcast %c8_i32_60 : i32 to vector<8x128xi32>
    %187 = arith.shrui %185, %186 : vector<8x128xi32>
    %188 = arith.sitofp %187 : vector<8x128xi32> to vector<8x128xf32>
    %cst_61 = arith.constant 5.96046448E-8 : f32
    %189 = vector.broadcast %cst_61 : f32 to vector<8x128xf32>
    %190 = arith.mulf %188, %189 : vector<8x128xf32>
    %cst_62 = arith.constant 1.000000e-10 : f32
    %191 = vector.broadcast %cst_62 : f32 to vector<8x128xf32>
    %192 = arith.maximumf %190, %191 : vector<8x128xf32>
    %193 = math.log %192 : vector<8x128xf32>
    %cst_63 = arith.constant 0.000000e+00 : f32
    %194 = vector.broadcast %cst_63 : f32 to vector<8x128xf32>
    %195 = arith.subf %194, %193 : vector<8x128xf32>
    %196 = math.log %195 : vector<8x128xf32>
    %cst_64 = arith.constant 0.000000e+00 : f32
    %197 = vector.broadcast %cst_64 : f32 to vector<8x128xf32>
    %198 = arith.subf %197, %196 : vector<8x128xf32>
    %199 = vector.broadcast %22 : f32 to vector<8x128xf32>
    %200 = arith.mulf %198, %199 : vector<8x128xf32>
    %201 = arith.addf %24, %200 : vector<8x128xf32>
    %cst_65 = arith.constant dense<0xFF800000> : vector<8xf32>
    %202 = vector.multi_reduction <maximumf>, %201, %cst_65 [1] : vector<8x128xf32> to vector<8xf32>
    %203 = vector.shape_cast %202 : vector<8xf32> to vector<8x1xf32>
    %204 = vector.broadcast %203 : vector<8x1xf32> to vector<8x128xf32>
    %205 = arith.subf %201, %204 : vector<8x128xf32>
    %206 = math.exp %205 : vector<8x128xf32>
    %cst_66 = arith.constant dense<0.000000e+00> : vector<8xf32>
    %207 = vector.multi_reduction <add>, %206, %cst_66 [1] : vector<8x128xf32> to vector<8xf32>
    %208 = vector.shape_cast %207 : vector<8xf32> to vector<8x1xf32>
    %209 = vector.broadcast %208 : vector<8x1xf32> to vector<8x128xf32>
    %210 = arith.divf %206, %209 : vector<8x128xf32>
    %211 = arith.maximumf %167, %210 : vector<8x128xf32>
    %c4_i32 = arith.constant 4 : i32
    %c0_67 = arith.constant 0 : index
    %c0_68 = arith.constant 0 : index
    %212 = vector.load %arg17[%c0_67, %c0_68] : memref<8x128xf32, #tpu.memory_space<vmem>>, vector<8x128xf32>
    tpu.vector_store %arg17[%c0_67, %c0_68], %211 {strides = array<i32>} : memref<8x128xf32, #tpu.memory_space<vmem>>, vector<8x128xf32>,
    %213 = arith.extf %0 : vector<8x128xbf16> to vector<8x128xf32>
    %214 = arith.mulf %213, %211 : vector<8x128xf32>
    %215 = arith.truncf %214 : vector<8x128xf32> to vector<8x128xbf16>
    %c0_69 = arith.constant 0 : index
    %c0_70 = arith.constant 0 : index
    %216 = vector.load %arg10[%c0_69, %c0_70] : memref<128x256xbf16, #tpu.memory_space<vmem>>, vector<128x256xbf16>
    %cst_71 = arith.constant dense<0.000000e+00> : vector<8x256xf32>
    %217 = tpu.matmul %215, %216, %cst_71 {dimension_numbers = #tpu.dot_dimension_numbers<[1], [0], [0], [1], [0, 0, 1, 1], [], []>} : vector<8x128xbf16>, vector<128x256xbf16>, vector<8x256xf32> -> vector<8x256xf32>
    %c0_72 = arith.constant 0 : index
    %c0_73 = arith.constant 0 : index
    %218 = vector.load %arg11[%c0_72, %c0_73] : memref<1x256xf32, #tpu.memory_space<vmem>>, vector<1x256xf32>
    %219 = vector.broadcast %218 : vector<1x256xf32> to vector<8x256xf32>
    %220 = arith.addf %217, %219 : vector<8x256xf32>
    %cst_74 = arith.constant 0.000000e+00 : f32
    %221 = vector.broadcast %cst_74 : f32 to vector<8x256xf32>
    %222 = arith.maximumf %220, %221 : vector<8x256xf32>
    %223 = arith.truncf %222 : vector<8x256xf32> to vector<8x256xbf16>
    %c0_75 = arith.constant 0 : index
    %c0_76 = arith.constant 0 : index
    %224 = vector.load %arg12[%c0_75, %c0_76] : memref<256x256xbf16, #tpu.memory_space<vmem>>, vector<256x256xbf16>
    %cst_77 = arith.constant dense<0.000000e+00> : vector<8x256xf32>
    %225 = tpu.matmul %223, %224, %cst_77 {dimension_numbers = #tpu.dot_dimension_numbers<[1], [0], [0], [1], [0, 0, 1, 1], [], []>} : vector<8x256xbf16>, vector<256x256xbf16>, vector<8x256xf32> -> vector<8x256xf32>
    %c0_78 = arith.constant 0 : index
    %c0_79 = arith.constant 0 : index
    %226 = vector.load %arg13[%c0_78, %c0_79] : memref<1x256xf32, #tpu.memory_space<vmem>>, vector<1x256xf32>
    %227 = vector.broadcast %226 : vector<1x256xf32> to vector<8x256xf32>
    %228 = arith.addf %225, %227 : vector<8x256xf32>
    %cst_80 = arith.constant 0.000000e+00 : f32
    %229 = vector.broadcast %cst_80 : f32 to vector<8x256xf32>
    %230 = arith.maximumf %228, %229 : vector<8x256xf32>
    %c0_81 = arith.constant 0 : index
    %c0_82 = arith.constant 0 : index
    %231 = vector.load %arg14[%c0_81, %c0_82] : memref<1x256xf32, #tpu.memory_space<vmem>>, vector<1x256xf32>
    %232 = vector.broadcast %231 : vector<1x256xf32> to vector<8x256xf32>
    %233 = arith.mulf %230, %232 : vector<8x256xf32>
    %cst_83 = arith.constant dense<0.000000e+00> : vector<8xf32>
    %234 = vector.multi_reduction <add>, %233, %cst_83 [1] : vector<8x256xf32> to vector<8xf32>
    %235 = vector.shape_cast %234 : vector<8xf32> to vector<8x1xf32>
    %c0_84 = arith.constant 0 : index
    %c0_85 = arith.constant 0 : index
    %236 = vector.load %arg15[%c0_84, %c0_85] : memref<1x1xf32, #tpu.memory_space<vmem>>, vector<1x1xf32>
    %237 = vector.broadcast %236 : vector<1x1xf32> to vector<8x1xf32>
    %238 = arith.addf %235, %237 : vector<8x1xf32>
    %c0_86 = arith.constant 0 : index
    %c0_87 = arith.constant 0 : index
    %239 = vector.load %arg16[%c0_86, %c0_87] : memref<8x1xf32, #tpu.memory_space<vmem>>, vector<8x1xf32>
    tpu.vector_store %arg16[%c0_86, %c0_87], %238 {strides = array<i32>} : memref<8x1xf32, #tpu.memory_space<vmem>>, vector<8x1xf32>,
    return
  }
  func.func @transform_0(%arg0: i32, %arg1: memref<1xi32, #tpu.memory_space<smem>>, %arg2: memref<1xf32, #tpu.memory_space<smem>>) -> (i32, i32) {
    %c0_i32 = arith.constant 0 : i32
    %c0_i32_0 = arith.constant 0 : i32
    return %arg0, %c0_i32 : i32, i32
  }
  func.func @transform_1(%arg0: i32, %arg1: memref<1xi32, #tpu.memory_space<smem>>, %arg2: memref<1xf32, #tpu.memory_space<smem>>) -> (i32, i32) {
    %c0_i32 = arith.constant 0 : i32
    %c0_i32_0 = arith.constant 0 : i32
    %c0_i32_1 = arith.constant 0 : i32
    return %c0_i32, %c0_i32_0 : i32, i32
  }
  func.func @transform_2(%arg0: i32, %arg1: memref<1xi32, #tpu.memory_space<smem>>, %arg2: memref<1xf32, #tpu.memory_space<smem>>) -> (i32, i32) {
    %c0_i32 = arith.constant 0 : i32
    %c0_i32_0 = arith.constant 0 : i32
    %c0_i32_1 = arith.constant 0 : i32
    return %c0_i32, %c0_i32_0 : i32, i32
  }
  func.func @transform_3(%arg0: i32, %arg1: memref<1xi32, #tpu.memory_space<smem>>, %arg2: memref<1xf32, #tpu.memory_space<smem>>) -> (i32, i32) {
    %c0_i32 = arith.constant 0 : i32
    %c0_i32_0 = arith.constant 0 : i32
    %c0_i32_1 = arith.constant 0 : i32
    return %c0_i32, %c0_i32_0 : i32, i32
  }
  func.func @transform_4(%arg0: i32, %arg1: memref<1xi32, #tpu.memory_space<smem>>, %arg2: memref<1xf32, #tpu.memory_space<smem>>) -> (i32, i32) {
    %c0_i32 = arith.constant 0 : i32
    %c0_i32_0 = arith.constant 0 : i32
    %c0_i32_1 = arith.constant 0 : i32
    return %c0_i32, %c0_i32_0 : i32, i32
  }
  func.func @transform_5(%arg0: i32, %arg1: memref<1xi32, #tpu.memory_space<smem>>, %arg2: memref<1xf32, #tpu.memory_space<smem>>) -> (i32, i32) {
    %c0_i32 = arith.constant 0 : i32
    %c0_i32_0 = arith.constant 0 : i32
    %c0_i32_1 = arith.constant 0 : i32
    return %c0_i32, %c0_i32_0 : i32, i32
  }
  func.func @transform_6(%arg0: i32, %arg1: memref<1xi32, #tpu.memory_space<smem>>, %arg2: memref<1xf32, #tpu.memory_space<smem>>) -> (i32, i32) {
    %c0_i32 = arith.constant 0 : i32
    %c0_i32_0 = arith.constant 0 : i32
    %c0_i32_1 = arith.constant 0 : i32
    return %c0_i32, %c0_i32_0 : i32, i32
  }
  func.func @transform_7(%arg0: i32, %arg1: memref<1xi32, #tpu.memory_space<smem>>, %arg2: memref<1xf32, #tpu.memory_space<smem>>) -> (i32, i32) {
    %c0_i32 = arith.constant 0 : i32
    %c0_i32_0 = arith.constant 0 : i32
    %c0_i32_1 = arith.constant 0 : i32
    return %c0_i32, %c0_i32_0 : i32, i32
  }
  func.func @transform_8(%arg0: i32, %arg1: memref<1xi32, #tpu.memory_space<smem>>, %arg2: memref<1xf32, #tpu.memory_space<smem>>) -> (i32, i32) {
    %c0_i32 = arith.constant 0 : i32
    %c0_i32_0 = arith.constant 0 : i32
    %c0_i32_1 = arith.constant 0 : i32
    return %c0_i32, %c0_i32_0 : i32, i32
  }
  func.func @transform_9(%arg0: i32, %arg1: memref<1xi32, #tpu.memory_space<smem>>, %arg2: memref<1xf32, #tpu.memory_space<smem>>) -> (i32, i32) {
    %c0_i32 = arith.constant 0 : i32
    %c0_i32_0 = arith.constant 0 : i32
    %c0_i32_1 = arith.constant 0 : i32
    return %c0_i32, %c0_i32_0 : i32, i32
  }
  func.func @transform_10(%arg0: i32, %arg1: memref<1xi32, #tpu.memory_space<smem>>, %arg2: memref<1xf32, #tpu.memory_space<smem>>) -> (i32, i32) {
    %c0_i32 = arith.constant 0 : i32
    %c0_i32_0 = arith.constant 0 : i32
    %c0_i32_1 = arith.constant 0 : i32
    return %c0_i32, %c0_i32_0 : i32, i32
  }
  func.func @transform_11(%arg0: i32, %arg1: memref<1xi32, #tpu.memory_space<smem>>, %arg2: memref<1xf32, #tpu.memory_space<smem>>) -> (i32, i32) {
    %c0_i32 = arith.constant 0 : i32
    %c0_i32_0 = arith.constant 0 : i32
    %c0_i32_1 = arith.constant 0 : i32
    return %c0_i32, %c0_i32_0 : i32, i32
  }
  func.func @transform_12(%arg0: i32, %arg1: memref<1xi32, #tpu.memory_space<smem>>, %arg2: memref<1xf32, #tpu.memory_space<smem>>) -> (i32, i32) {
    %c0_i32 = arith.constant 0 : i32
    %c0_i32_0 = arith.constant 0 : i32
    %c0_i32_1 = arith.constant 0 : i32
    return %c0_i32, %c0_i32_0 : i32, i32
  }
  func.func @transform_13(%arg0: i32, %arg1: memref<1xi32, #tpu.memory_space<smem>>, %arg2: memref<1xf32, #tpu.memory_space<smem>>) -> (i32, i32) {
    %c0_i32 = arith.constant 0 : i32
    %c0_i32_0 = arith.constant 0 : i32
    return %arg0, %c0_i32 : i32, i32
  }
  func.func @transform_14(%arg0: i32, %arg1: memref<1xi32, #tpu.memory_space<smem>>, %arg2: memref<1xf32, #tpu.memory_space<smem>>) -> (i32, i32) {
    %c0_i32 = arith.constant 0 : i32
    %c0_i32_0 = arith.constant 0 : i32
    return %arg0, %c0_i32 : i32, i32
  }
}

</mosaic_0001>

<llo_original>
// kernel: tpu_custom_call.1
$region0: #{tpu_custom_call.1}
  #allocation0 [shape = 'u32[]', space=smem, size = 0x4, offset = 0x4, fixed_abs, tag = 'smem constant byte address 0x4 - core index']
  #allocation1 [shape = 'u32[72,128]{1,0:T(1,128)}', space=vmem, size = 0x9000, scoped, tag = 'internal scratch']
  #allocation2 [shape = 's32[1]{0}', space=sflag, size = 0x4, scoped, tag = 'scoped memory for tpu_custom_call.1']
  #allocation3 [shape = 's32[1]{0:T(128)S(6)}', space=smem, size = 0x200, scoped, tag = 'prefetched SMEM operand 0']
  #allocation4 [shape = 'f32[1]{0:T(128)S(6)}', space=smem, size = 0x200, scoped, tag = 'prefetched SMEM operand 1']
  #allocation5 [shape = 'f32[1,1]{1,0:T(1,128)S(1)}', space=vmem, size = 0x200, scoped, tag = 'scoped memory for tpu_custom_call.1']
  %s0 = inlined_call_operand.<no memory space> [shape: s32[1], index: 0, kind: input, shape index: {}]
  %s1 = inlined_call_operand.<no memory space> [shape: f32[1], index: 1, kind: input, shape index: {}]
  %s2 = inlined_call_operand.vmem [shape: bf16[8,128], index: 2, kind: input, shape index: {}]
  %s3 = inlined_call_operand.hbm [shape: bf16[128,128], index: 3, kind: input, shape index: {}]
  %s4 = inlined_call_operand.hbm [shape: f32[1,128], index: 4, kind: input, shape index: {}]
  %s5 = inlined_call_operand.hbm [shape: bf16[128,128], index: 5, kind: input, shape index: {}]
  %s6 = inlined_call_operand.hbm [shape: f32[1,128], index: 6, kind: input, shape index: {}]
  %s7 = inlined_call_operand.hbm [shape: bf16[128,128], index: 7, kind: input, shape index: {}]
  %s8 = inlined_call_operand.vmem [shape: f32[1,128], index: 8, kind: input, shape index: {}]
  %s9 = inlined_call_operand.hbm [shape: bf16[128,256], index: 9, kind: input, shape index: {}]
  %s10 = inlined_call_operand.vmem [shape: f32[1,256], index: 10, kind: input, shape index: {}]
  %s11 = inlined_call_operand.hbm [shape: bf16[256,256], index: 11, kind: input, shape index: {}]
  %s12 = inlined_call_operand.vmem [shape: f32[1,256], index: 12, kind: input, shape index: {}]
  %s13 = inlined_call_operand.vmem [shape: f32[1,256], index: 13, kind: input, shape index: {}]
  %s14 = inlined_call_operand.<no memory space> [shape: f32[1,1], index: 14, kind: input, shape index: {}]
  %s15 = inlined_call_operand.vmem [shape: f32[8,1], index: 15, kind: output, shape index: {0}]
  %s16 = inlined_call_operand.hbm [shape: f32[8,128], index: 16, kind: output, shape index: {1}]
  %17 = xla_tuple %s15, %s16
  %s18 = sld [smem:[#allocation0]]
  $region98: #{tpu_custom_call.1} parent=0
    _
  %s20 = ssub.s32 1, %s18
  %s21 = scalar_select 0, %s20, %s18
  %22 = sst [smem:[#allocation3]] %s0
  %23 = sst [smem:[#allocation4]] %s1
  %v24 = vstv %s14
  %25 = vst [vmem:[#allocation5] sm:$0x1] %v24
  $region1: #{tpu_custom_call.1} parent=0
    #allocation6 [shape = 'u8[32768]{0}', space=vmem, size = 0x8000, scoped, tag = 'input window, operand 3, single buffered']
    #allocation7 [shape = 's32[1]{0}', space=sflag, size = 0x4, scoped, tag = 'scoped memory for tpu_custom_call.1']
    #allocation8 [shape = 's32[1]{0}', space=sflag, size = 0x4, scoped, tag = 'scoped memory for tpu_custom_call.1']
    #allocation9 [shape = 'u8[512]{0}', space=vmem, size = 0x400, scoped, tag = 'input window, operand 4, single buffered']
    #allocation10 [shape = 's32[1]{0}', space=sflag, size = 0x4, scoped, tag = 'scoped memory for tpu_custom_call.1']
    #allocation11 [shape = 'u8[32768]{0}', space=vmem, size = 0x8000, scoped, tag = 'input window, operand 5, single buffered']
    #allocation12 [shape = 'u8[512]{0}', space=vmem, size = 0x400, scoped, tag = 'input window, operand 6, single buffered']
    #allocation13 [shape = 's32[1]{0}', space=sflag, size = 0x4, scoped, tag = 'scoped memory for tpu_custom_call.1']
    #allocation14 [shape = 'u8[32768]{0}', space=vmem, size = 0x8000, scoped, tag = 'input window, operand 7, single buffered']
    #allocation15 [shape = 'u8[65536]{0}', space=vmem, size = 0x10000, scoped, tag = 'input window, operand 9, single buffered']
    #allocation16 [shape = 's32[1]{0}', space=sflag, size = 0x4, scoped, tag = 'scoped memory for tpu_custom_call.1']
    #allocation17 [shape = 'u8[131072]{0}', space=vmem, size = 0x20000, scoped, tag = 'input window, operand 11, single buffered']
    #allocation18 [shape = 'u8[4096]{0}', space=vmem, size = 0x1000, scoped, tag = 'output window, operand 1, single buffered']
    %26 = vsyncpa [#allocation7], 0
    %27 = vsyncpa [#allocation10], 0
    %28 = vsyncpa [#allocation13], 0
    %29 = vsyncpa [#allocation16], 0
    %30 = vsyncpa [#allocation8], 0
    // Predicated region
    $region2: #{tpu_custom_call.1} parent=1 // pred_check
      _
    $region3: #{tpu_custom_call.1} parent=1 // pred_check_branch
      %32 = sbr.rel (0) target = $region5
    $region4: #{tpu_custom_call.1} parent=1 // pred_region
      _
    $region5: #{tpu_custom_call.1} parent=1 // pred_fallthru
      _
    // Predicated region
    $region6: #{tpu_custom_call.1} parent=1 // pred_check
      _
    $region7: #{tpu_custom_call.1} parent=1 // pred_check_branch
      %34 = sbr.rel (0) target = $region9
    $region8: #{tpu_custom_call.1} parent=1 // pred_region
      %36 = vsyncadd [#allocation7], 0
      %s37 = sshll.u32 %s3, 4
      %s38 = int_to_ptr.hbm [resolvable:$true] %s37
      %s39 = sshll.u32 [#allocation6], 4
      %s40 = int_to_ptr.vmem [resolvable:$true] %s39
      %45 = dma.hbm_to_vmem [thread:$0]  %s38, 1024, %s40, [#allocation7], 64, 64, 4
    $region9: #{tpu_custom_call.1} parent=1 // pred_fallthru
      _
    // Predicated region
    $region10: #{tpu_custom_call.1} parent=1 // pred_check
      _
    $region11: #{tpu_custom_call.1} parent=1 // pred_check_branch
      %47 = sbr.rel (0) target = $region13
    $region12: #{tpu_custom_call.1} parent=1 // pred_region
      %49 = vsyncadd [#allocation10], 0
      %s51 = sshll.u32 %s4, 4
      %s52 = int_to_ptr.hbm [resolvable:$true] %s51
      %s53 = sshll.u32 [#allocation9], 4
      %s54 = int_to_ptr.vmem [resolvable:$true] %s53
      %56 = dma.hbm_to_vmem [thread:$0]  %s52, 16, %s54, [#allocation10]
    $region13: #{tpu_custom_call.1} parent=1 // pred_fallthru
      _
    // Predicated region
    $region14: #{tpu_custom_call.1} parent=1 // pred_check
      _
    $region15: #{tpu_custom_call.1} parent=1 // pred_check_branch
      %58 = sbr.rel (0) target = $region17
    $region16: #{tpu_custom_call.1} parent=1 // pred_region
      %60 = vsyncadd [#allocation10], 0
      %s61 = sshll.u32 %s5, 4
      %s62 = int_to_ptr.hbm [resolvable:$true] %s61
      %s63 = sshll.u32 [#allocation11], 4
      %s64 = int_to_ptr.vmem [resolvable:$true] %s63
      %69 = dma.hbm_to_vmem [thread:$0]  %s62, 1024, %s64, [#allocation10], 64, 64, 4
    $region17: #{tpu_custom_call.1} parent=1 // pred_fallthru
      _
    // Predicated region
    $region18: #{tpu_custom_call.1} parent=1 // pred_check
      _
    $region19: #{tpu_custom_call.1} parent=1 // pred_check_branch
      %71 = sbr.rel (0) target = $region21
    $region20: #{tpu_custom_call.1} parent=1 // pred_region
      %73 = vsyncadd [#allocation13], 0
      %s75 = sshll.u32 %s6, 4
      %s76 = int_to_ptr.hbm [resolvable:$true] %s75
      %s77 = sshll.u32 [#allocation12], 4
      %s78 = int_to_ptr.vmem [resolvable:$true] %s77
      %80 = dma.hbm_to_vmem [thread:$0]  %s76, 16, %s78, [#allocation13]
    $region21: #{tpu_custom_call.1} parent=1 // pred_fallthru
      _
    // Predicated region
    $region22: #{tpu_custom_call.1} parent=1 // pred_check
      _
    $region23: #{tpu_custom_call.1} parent=1 // pred_check_branch
      %82 = sbr.rel (0) target = $region25
    $region24: #{tpu_custom_call.1} parent=1 // pred_region
      %84 = vsyncadd [#allocation13], 0
      %s85 = sshll.u32 %s7, 4
      %s86 = int_to_ptr.hbm [resolvable:$true] %s85
      %s87 = sshll.u32 [#allocation14], 4
      %s88 = int_to_ptr.vmem [resolvable:$true] %s87
      %93 = dma.hbm_to_vmem [thread:$0]  %s86, 1024, %s88, [#allocation13], 64, 64, 4
    $region25: #{tpu_custom_call.1} parent=1 // pred_fallthru
      _
    // Predicated region
    $region26: #{tpu_custom_call.1} parent=1 // pred_check
      _
    $region27: #{tpu_custom_call.1} parent=1 // pred_check_branch
      %95 = sbr.rel (0) target = $region29
    $region28: #{tpu_custom_call.1} parent=1 // pred_region
      _
    $region29: #{tpu_custom_call.1} parent=1 // pred_fallthru
      _
    // Predicated region
    $region30: #{tpu_custom_call.1} parent=1 // pred_check
      _
    $region31: #{tpu_custom_call.1} parent=1 // pred_check_branch
      %97 = sbr.rel (0) target = $region33
    $region32: #{tpu_custom_call.1} parent=1 // pred_region
      %99 = vsyncadd [#allocation16], 0
      %s100 = sshll.u32 %s9, 4
      %s101 = int_to_ptr.hbm [resolvable:$true] %s100
      %s102 = sshll.u32 [#allocation15], 4
      %s103 = int_to_ptr.vmem [resolvable:$true] %s102
      %108 = dma.hbm_to_vmem [thread:$0]  %s101, 2048, %s103, [#allocation16], 128, 128, 8
    $region33: #{tpu_custom_call.1} parent=1 // pred_fallthru
      _
    // Predicated region
    $region34: #{tpu_custom_call.1} parent=1 // pred_check
      _
    $region35: #{tpu_custom_call.1} parent=1 // pred_check_branch
      %110 = sbr.rel (0) target = $region37
    $region36: #{tpu_custom_call.1} parent=1 // pred_region
      _
    $region37: #{tpu_custom_call.1} parent=1 // pred_fallthru
      _
    // Predicated region
    $region38: #{tpu_custom_call.1} parent=1 // pred_check
      _
    $region39: #{tpu_custom_call.1} parent=1 // pred_check_branch
      %112 = sbr.rel (0) target = $region41
    $region40: #{tpu_custom_call.1} parent=1 // pred_region
      %114 = vsyncadd [#allocation16], 0
      %s115 = sshll.u32 %s11, 4
      %s116 = int_to_ptr.hbm [resolvable:$true] %s115
      %s117 = sshll.u32 [#allocation17], 4
      %s118 = int_to_ptr.vmem [resolvable:$true] %s117
      %123 = dma.hbm_to_vmem [thread:$0]  %s116, 4096, %s118, [#allocation16], 128, 128, 8
    $region41: #{tpu_custom_call.1} parent=1 // pred_fallthru
      _
    // Predicated region
    $region42: #{tpu_custom_call.1} parent=1 // pred_check
      _
    $region43: #{tpu_custom_call.1} parent=1 // pred_check_branch
      %125 = sbr.rel (0) target = $region45
    $region44: #{tpu_custom_call.1} parent=1 // pred_region
      _
    $region45: #{tpu_custom_call.1} parent=1 // pred_fallthru
      _
    // Predicated region
    $region46: #{tpu_custom_call.1} parent=1 // pred_check
      _
    $region47: #{tpu_custom_call.1} parent=1 // pred_check_branch
      %127 = sbr.rel (0) target = $region49
    $region48: #{tpu_custom_call.1} parent=1 // pred_region
      _
    $region49: #{tpu_custom_call.1} parent=1 // pred_fallthru
      _
    // Predicated region
    $region50: #{tpu_custom_call.1} parent=1 // pred_check
      _
    $region51: #{tpu_custom_call.1} parent=1 // pred_check_branch
      %129 = sbr.rel (0) target = $region53
    $region52: #{tpu_custom_call.1} parent=1 // pred_region
      _
    $region53: #{tpu_custom_call.1} parent=1 // pred_fallthru
      _
    // Predicated region
    $region54: #{tpu_custom_call.1} parent=1 // pred_check
      _
    $region55: #{tpu_custom_call.1} parent=1 // pred_check_branch
      %131 = sbr.rel (0) target = $region57
    $region56: #{tpu_custom_call.1} parent=1 // pred_region
      %133 = dma.done [#allocation7], 1024
    $region57: #{tpu_custom_call.1} parent=1 // pred_fallthru
      _
    // Predicated region
    $region58: #{tpu_custom_call.1} parent=1 // pred_check
      _
    $region59: #{tpu_custom_call.1} parent=1 // pred_check_branch
      %135 = sbr.rel (0) target = $region61
    $region60: #{tpu_custom_call.1} parent=1 // pred_region
      %137 = dma.done [#allocation10], 16
    $region61: #{tpu_custom_call.1} parent=1 // pred_fallthru
      _
    // Predicated region
    $region62: #{tpu_custom_call.1} parent=1 // pred_check
      _
    $region63: #{tpu_custom_call.1} parent=1 // pred_check_branch
      %139 = sbr.rel (0) target = $region65
    $region64: #{tpu_custom_call.1} parent=1 // pred_region
      %141 = dma.done [#allocation10], 1024
    $region65: #{tpu_custom_call.1} parent=1 // pred_fallthru
      _
    // Predicated region
    $region66: #{tpu_custom_call.1} parent=1 // pred_check
      _
    $region67: #{tpu_custom_call.1} parent=1 // pred_check_branch
      %143 = sbr.rel (0) target = $region69
    $region68: #{tpu_custom_call.1} parent=1 // pred_region
      %145 = dma.done [#allocation13], 16
    $region69: #{tpu_custom_call.1} parent=1 // pred_fallthru
      _
    // Predicated region
    $region70: #{tpu_custom_call.1} parent=1 // pred_check
      _
    $region71: #{tpu_custom_call.1} parent=1 // pred_check_branch
      %147 = sbr.rel (0) target = $region73
    $region72: #{tpu_custom_call.1} parent=1 // pred_region
      %149 = dma.done [#allocation13], 1024
    $region73: #{tpu_custom_call.1} parent=1 // pred_fallthru
      _
    // Predicated region
    $region74: #{tpu_custom_call.1} parent=1 // pred_check
      _
    $region75: #{tpu_custom_call.1} parent=1 // pred_check_branch
      %151 = sbr.rel (0) target = $region77
    $region76: #{tpu_custom_call.1} parent=1 // pred_region
      %153 = dma.done [#allocation16], 2048
    $region77: #{tpu_custom_call.1} parent=1 // pred_fallthru
      _
    // Predicated region
    $region78: #{tpu_custom_call.1} parent=1 // pred_check
      _
    $region79: #{tpu_custom_call.1} parent=1 // pred_check_branch
      %155 = sbr.rel (0) target = $region81
    $region80: #{tpu_custom_call.1} parent=1 // pred_region
      %157 = dma.done [#allocation16], 4096
    $region81: #{tpu_custom_call.1} parent=1 // pred_fallthru
      _
    %v158 = vld [vmem:[%s2] sm:$0xf]
    %v159 = vld [vmem:[#allocation6] sm:$0xf]
    %v160 = vld [vmem:[#allocation6 + $0x4] sm:$0xf]
    %v161 = vld [vmem:[#allocation6 + $0x8] sm:$0xf]
    %v162 = vld [vmem:[#allocation6 + $0xc] sm:$0xf]
    %v163 = vld [vmem:[#allocation6 + $0x10] sm:$0xf]
    %v164 = vld [vmem:[#allocation6 + $0x14] sm:$0xf]
    %v165 = vld [vmem:[#allocation6 + $0x18] sm:$0xf]
    %v166 = vld [vmem:[#allocation6 + $0x1c] sm:$0xf]
    %v167 = vld [vmem:[#allocation6 + $0x20] sm:$0xf]
    %v168 = vld [vmem:[#allocation6 + $0x24] sm:$0xf]
    %v169 = vld [vmem:[#allocation6 + $0x28] sm:$0xf]
    %v170 = vld [vmem:[#allocation6 + $0x2c] sm:$0xf]
    %v171 = vld [vmem:[#allocation6 + $0x30] sm:$0xf]
    %v172 = vld [vmem:[#allocation6 + $0x34] sm:$0xf]
    %v173 = vld [vmem:[#allocation6 + $0x38] sm:$0xf]
    %v174 = vld [vmem:[#allocation6 + $0x3c] sm:$0xf]
    %v175 = vld [vmem:[#allocation9] sm:$0x1]
    %v177 = vperm.slane %v175, 0
    %v195 = vunpack.c.l.b16 %v159
    %v196 = vunpack.c.l.b16 %v160
    %v197 = vunpack.c.l.b16 %v161
    %v198 = vunpack.c.l.b16 %v162
    %v199 = vunpack.c.l.b16 %v163
    %v200 = vunpack.c.l.b16 %v164
    %v201 = vunpack.c.l.b16 %v165
    %v202 = vunpack.c.l.b16 %v166
    %v203 = vunpack.c.l.b16 %v167
    %v204 = vunpack.c.l.b16 %v168
    %v205 = vunpack.c.l.b16 %v169
    %v206 = vunpack.c.l.b16 %v170
    %v207 = vunpack.c.l.b16 %v171
    %v208 = vunpack.c.l.b16 %v172
    %v209 = vunpack.c.l.b16 %v173
    %v210 = vunpack.c.l.b16 %v174
    %v211 = vpack.c.b16 %v196, %v195
    %v212 = vpack.c.b16 %v198, %v197
    %v213 = vpack.c.b16 %v200, %v199
    %v214 = vpack.c.b16 %v202, %v201
    %v215 = vpack.c.b16 %v204, %v203
    %v216 = vpack.c.b16 %v206, %v205
    %v217 = vpack.c.b16 %v208, %v207
    %v218 = vpack.c.b16 %v210, %v209
    %227 = vmatpush.bf16.msra.mxu0 %v218
    %228 = vmatpush.bf16.msra.mxu0 %v217
    %229 = vmatpush.bf16.msra.mxu0 %v216
    %230 = vmatpush.bf16.msra.mxu0 %v215
    %231 = vmatpush.bf16.msra.mxu0 %v214
    %232 = vmatpush.bf16.msra.mxu0 %v213
    %233 = vmatpush.bf16.msra.mxu0 %v212
    %234 = vmatpush.bf16.msra.mxu0 %v211
    %235 = vmatmul.bf16.gmra.mxu0 %v158
    %v236 = vpop.f32.mrf.mxu0
    %v237 = vadd.f32 %v177, %v236
    %v238 = vpop.f32.mrf.mxu0
    %239 = vdwg.mxu0
    %v240 = vmax.f32 %v237, 0.0
    %v241 = vpack.c.bf16 %v240, %v240
    %v242 = vld [vmem:[#allocation11] sm:$0xf]
    %v243 = vld [vmem:[#allocation11 + $0x4] sm:$0xf]
    %v244 = vld [vmem:[#allocation11 + $0x8] sm:$0xf]
    %v245 = vld [vmem:[#allocation11 + $0xc] sm:$0xf]
    %v246 = vld [vmem:[#allocation11 + $0x10] sm:$0xf]
    %v247 = vld [vmem:[#allocation11 + $0x14] sm:$0xf]
    %v248 = vld [vmem:[#allocation11 + $0x18] sm:$0xf]
    %v249 = vld [vmem:[#allocation11 + $0x1c] sm:$0xf]
    %v250 = vld [vmem:[#allocation11 + $0x20] sm:$0xf]
    %v251 = vld [vmem:[#allocation11 + $0x24] sm:$0xf]
    %v252 = vld [vmem:[#allocation11 + $0x28] sm:$0xf]
    %v253 = vld [vmem:[#allocation11 + $0x2c] sm:$0xf]
    %v254 = vld [vmem:[#allocation11 + $0x30] sm:$0xf]
    %v255 = vld [vmem:[#allocation11 + $0x34] sm:$0xf]
    %v256 = vld [vmem:[#allocation11 + $0x38] sm:$0xf]
    %v257 = vld [vmem:[#allocation11 + $0x3c] sm:$0xf]
    %v258 = vld [vmem:[#allocation12] sm:$0x1]
    %v260 = vperm.slane %v258, 0
    %v278 = vunpack.c.l.b16 %v242
    %v279 = vunpack.c.l.b16 %v243
    %v280 = vunpack.c.l.b16 %v244
    %v281 = vunpack.c.l.b16 %v245
    %v282 = vunpack.c.l.b16 %v246
    %v283 = vunpack.c.l.b16 %v247
    %v284 = vunpack.c.l.b16 %v248
    %v285 = vunpack.c.l.b16 %v249
    %v286 = vunpack.c.l.b16 %v250
    %v287 = vunpack.c.l.b16 %v251
    %v288 = vunpack.c.l.b16 %v252
    %v289 = vunpack.c.l.b16 %v253
    %v290 = vunpack.c.l.b16 %v254
    %v291 = vunpack.c.l.b16 %v255
    %v292 = vunpack.c.l.b16 %v256
    %v293 = vunpack.c.l.b16 %v257
    %v294 = vpack.c.b16 %v279, %v278
    %v295 = vpack.c.b16 %v281, %v280
    %v296 = vpack.c.b16 %v283, %v282
    %v297 = vpack.c.b16 %v285, %v284
    %v298 = vpack.c.b16 %v287, %v286
    %v299 = vpack.c.b16 %v289, %v288
    %v300 = vpack.c.b16 %v291, %v290
    %v301 = vpack.c.b16 %v293, %v292
    %310 = vmatpush.bf16.msra.mxu0 %v301
    %311 = vmatpush.bf16.msra.mxu0 %v300
    %312 = vmatpush.bf16.msra.mxu0 %v299
    %313 = vmatpush.bf16.msra.mxu0 %v298
    %314 = vmatpush.bf16.msra.mxu0 %v297
    %315 = vmatpush.bf16.msra.mxu0 %v296
    %316 = vmatpush.bf16.msra.mxu0 %v295
    %317 = vmatpush.bf16.msra.mxu0 %v294
    %318 = vmatmul.bf16.gmra.mxu0 %v241
    %v319 = vpop.f32.mrf.mxu0
    %v320 = vadd.f32 %v260, %v319
    %v321 = vpop.f32.mrf.mxu0
    %322 = vdwg.mxu0
    %v323 = vmax.f32 %v320, 0.0
    %v324 = vpack.c.bf16 %v323, %v323
    %v325 = vld [vmem:[#allocation14] sm:$0xf]
    %v326 = vld [vmem:[#allocation14 + $0x4] sm:$0xf]
    %v327 = vld [vmem:[#allocation14 + $0x8] sm:$0xf]
    %v328 = vld [vmem:[#allocation14 + $0xc] sm:$0xf]
    %v329 = vld [vmem:[#allocation14 + $0x10] sm:$0xf]
    %v330 = vld [vmem:[#allocation14 + $0x14] sm:$0xf]
    %v331 = vld [vmem:[#allocation14 + $0x18] sm:$0xf]
    %v332 = vld [vmem:[#allocation14 + $0x1c] sm:$0xf]
    %v333 = vld [vmem:[#allocation14 + $0x20] sm:$0xf]
    %v334 = vld [vmem:[#allocation14 + $0x24] sm:$0xf]
    %v335 = vld [vmem:[#allocation14 + $0x28] sm:$0xf]
    %v336 = vld [vmem:[#allocation14 + $0x2c] sm:$0xf]
    %v337 = vld [vmem:[#allocation14 + $0x30] sm:$0xf]
    %v338 = vld [vmem:[#allocation14 + $0x34] sm:$0xf]
    %v339 = vld [vmem:[#allocation14 + $0x38] sm:$0xf]
    %v340 = vld [vmem:[#allocation14 + $0x3c] sm:$0xf]
    %v341 = vld [vmem:[%s8] sm:$0x1]
    %v343 = vperm.slane %v341, 0
    %v361 = vunpack.c.l.b16 %v325
    %v362 = vunpack.c.l.b16 %v326
    %v363 = vunpack.c.l.b16 %v327
    %v364 = vunpack.c.l.b16 %v328
    %v365 = vunpack.c.l.b16 %v329
    %v366 = vunpack.c.l.b16 %v330
    %v367 = vunpack.c.l.b16 %v331
    %v368 = vunpack.c.l.b16 %v332
    %v369 = vunpack.c.l.b16 %v333
    %v370 = vunpack.c.l.b16 %v334
    %v371 = vunpack.c.l.b16 %v335
    %v372 = vunpack.c.l.b16 %v336
    %v373 = vunpack.c.l.b16 %v337
    %v374 = vunpack.c.l.b16 %v338
    %v375 = vunpack.c.l.b16 %v339
    %v376 = vunpack.c.l.b16 %v340
    %v377 = vpack.c.b16 %v362, %v361
    %v378 = vpack.c.b16 %v364, %v363
    %v379 = vpack.c.b16 %v366, %v365
    %v380 = vpack.c.b16 %v368, %v367
    %v381 = vpack.c.b16 %v370, %v369
    %v382 = vpack.c.b16 %v372, %v371
    %v383 = vpack.c.b16 %v374, %v373
    %v384 = vpack.c.b16 %v376, %v375
    %393 = vmatpush.bf16.msra.mxu0 %v384
    %394 = vmatpush.bf16.msra.mxu0 %v383
    %395 = vmatpush.bf16.msra.mxu0 %v382
    %396 = vmatpush.bf16.msra.mxu0 %v381
    %397 = vmatpush.bf16.msra.mxu0 %v380
    %398 = vmatpush.bf16.msra.mxu0 %v379
    %399 = vmatpush.bf16.msra.mxu0 %v378
    %400 = vmatpush.bf16.msra.mxu0 %v377
    %401 = vmatmul.bf16.gmra.mxu0 %v324
    %v402 = vpop.f32.mrf.mxu0
    %v403 = vadd.f32 %v343, %v402
    %v404 = vpop.f32.mrf.mxu0
    %405 = vdwg.mxu0
    %s406 = sld [smem:[#allocation4]]
    %v407 = vstv %s406
    %v408 = vmul.f32 %v403, %v407
    %v409 = vlaneseq
    %v410 = vshrl.u32 %v409, 7
    %v411 = vlaneseq
    %v412 = vand.u32 %v411, 127
    %s413 = smul.u32 0, 8
    %v414 = vstv %s413
    %v415 = vadd.s32 %v414, %v410
    %v416 = vmul.u32 %v415, 512
    %v417 = vadd.s32 %v416, %v412
    %s418 = sld [smem:[#allocation3]]
    %s419 = smul.u32 %s418, 1540483477
    %v420 = vstv %s419
    %v421 = vxor.u32 %v417, %v420
    %v422 = vshrl.u32 %v421, 16
    %v423 = vxor.u32 %v421, %v422
    %v424 = vmul.u32 %v423, 2146121005
    %v425 = vshrl.u32 %v424, 15
    %v426 = vxor.u32 %v424, %v425
    %v427 = vmul.u32 %v426, 2221713035
    %v428 = vshrl.u32 %v427, 16
    %v429 = vxor.u32 %v427, %v428
    %v430 = vshrl.u32 %v429, 8
    %v431 = vcvt.s32.f32 %v430
    %v432 = vmul.f32 %v431, 5.9604645e-08
    %v433 = vmax.f32 %v432, 1e-10
    %v434 = vlog2.pop %v433
    %v435 = vmul.f32 %v434, 0.6931472
    %v436 = vsub.f32 0.0, %v435
    %v437 = vlog2.pop %v436
    %v438 = vmul.f32 %v437, 0.6931472
    %v439 = vsub.f32 0.0, %v438
    %v440 = vmul.f32 %v439, %v407
    %v441 = vadd.f32 %v408, %v440
    %442 = vmax.xlane.f32.xlu0 %v441
    %v443 = vpop.xlane.xlu0 %442
    %v444 = vsub.f32 %v441, %v443
    %v445 = vmul.f32 %v444, 1.442695
    %v446 = vpow.pop %v445
    %447 = vadd.xlane.f32.xlu0 %v446
    %v448 = vpop.xlane.xlu0 %447
    %v449 = vrcp.pop %v448
    %v450 = vmul.f32 %v448, %v449
    %v451 = vsub.f32 1.0, %v450
    %v452 = vmul.f32 %v449, %v451
    %v453 = vadd.f32 %v449, %v452
    %vm454 = vweird.f32 %v448
    %vm455 = vweird.f32 %v449
    %vm456 = vmor %vm454, %vm455
    %v457 = vsel %vm456, %v449, %v453
    %v458 = vand.u32 2147483647, %v448
    %vm459 = vcmp.eq.f32.partialorder %v458, 8.507059e+37
    %v460 = vand.u32 %v448, 2147483648
    %v461 = vor.u32 1.1754944e-38, %v460
    %v462 = vsel %vm459, %v461, %v457
    %v463 = vmul.f32 %v446, %v462
    %v464 = vmax.f32 %v463, 0.0
    %v465 = vadd.s32 %v417, 128
    %v466 = vxor.u32 %v465, %v420
    %v467 = vshrl.u32 %v466, 16
    %v468 = vxor.u32 %v466, %v467
    %v469 = vmul.u32 %v468, 2146121005
    %v470 = vshrl.u32 %v469, 15
    %v471 = vxor.u32 %v469, %v470
    %v472 = vmul.u32 %v471, 2221713035
    %v473 = vshrl.u32 %v472, 16
    %v474 = vxor.u32 %v472, %v473
    %v475 = vshrl.u32 %v474, 8
    %v476 = vcvt.s32.f32 %v475
    %v477 = vmul.f32 %v476, 5.9604645e-08
    %v478 = vmax.f32 %v477, 1e-10
    %v479 = vlog2.pop %v478
    %v480 = vmul.f32 %v479, 0.6931472
    %v481 = vsub.f32 0.0, %v480
    %v482 = vlog2.pop %v481
    %v483 = vmul.f32 %v482, 0.6931472
    %v484 = vsub.f32 0.0, %v483
    %v485 = vmul.f32 %v484, %v407
    %v486 = vadd.f32 %v408, %v485
    %487 = vmax.xlane.f32.xlu0 %v486
    %v488 = vpop.xlane.xlu0 %487
    %v489 = vsub.f32 %v486, %v488
    %v490 = vmul.f32 %v489, 1.442695
    %v491 = vpow.pop %v490
    %492 = vadd.xlane.f32.xlu0 %v491
    %v493 = vpop.xlane.xlu0 %492
    %v494 = vrcp.pop %v493
    %v495 = vmul.f32 %v493, %v494
    %v496 = vsub.f32 1.0, %v495
    %v497 = vmul.f32 %v494, %v496
    %v498 = vadd.f32 %v494, %v497
    %vm499 = vweird.f32 %v493
    %vm500 = vweird.f32 %v494
    %vm501 = vmor %vm499, %vm500
    %v502 = vsel %vm501, %v494, %v498
    %v503 = vand.u32 2147483647, %v493
    %vm504 = vcmp.eq.f32.partialorder %v503, 8.507059e+37
    %v505 = vand.u32 %v493, 2147483648
    %v506 = vor.u32 1.1754944e-38, %v505
    %v507 = vsel %vm504, %v506, %v502
    %v508 = vmul.f32 %v491, %v507
    %v509 = vmax.f32 %v464, %v508
    %v510 = vadd.s32 %v417, 256
    %v511 = vxor.u32 %v510, %v420
    %v512 = vshrl.u32 %v511, 16
    %v513 = vxor.u32 %v511, %v512
    %v514 = vmul.u32 %v513, 2146121005
    %v515 = vshrl.u32 %v514, 15
    %v516 = vxor.u32 %v514, %v515
    %v517 = vmul.u32 %v516, 2221713035
    %v518 = vshrl.u32 %v517, 16
    %v519 = vxor.u32 %v517, %v518
    %v520 = vshrl.u32 %v519, 8
    %v521 = vcvt.s32.f32 %v520
    %v522 = vmul.f32 %v521, 5.9604645e-08
    %v523 = vmax.f32 %v522, 1e-10
    %v524 = vlog2.pop %v523
    %v525 = vmul.f32 %v524, 0.6931472
    %v526 = vsub.f32 0.0, %v525
    %v527 = vlog2.pop %v526
    %v528 = vmul.f32 %v527, 0.6931472
    %v529 = vsub.f32 0.0, %v528
    %v530 = vmul.f32 %v529, %v407
    %v531 = vadd.f32 %v408, %v530
    %532 = vmax.xlane.f32.xlu0 %v531
    %v533 = vpop.xlane.xlu0 %532
    %v534 = vsub.f32 %v531, %v533
    %v535 = vmul.f32 %v534, 1.442695
    %v536 = vpow.pop %v535
    %537 = vadd.xlane.f32.xlu0 %v536
    %v538 = vpop.xlane.xlu0 %537
    %v539 = vrcp.pop %v538
    %v540 = vmul.f32 %v538, %v539
    %v541 = vsub.f32 1.0, %v540
    %v542 = vmul.f32 %v539, %v541
    %v543 = vadd.f32 %v539, %v542
    %vm544 = vweird.f32 %v538
    %vm545 = vweird.f32 %v539
    %vm546 = vmor %vm544, %vm545
    %v547 = vsel %vm546, %v539, %v543
    %v548 = vand.u32 2147483647, %v538
    %vm549 = vcmp.eq.f32.partialorder %v548, 8.507059e+37
    %v550 = vand.u32 %v538, 2147483648
    %v551 = vor.u32 1.1754944e-38, %v550
    %v552 = vsel %vm549, %v551, %v547
    %v553 = vmul.f32 %v536, %v552
    %v554 = vmax.f32 %v509, %v553
    %v555 = vadd.s32 %v417, 384
    %v556 = vxor.u32 %v555, %v420
    %v557 = vshrl.u32 %v556, 16
    %v558 = vxor.u32 %v556, %v557
    %v559 = vmul.u32 %v558, 2146121005
    %v560 = vshrl.u32 %v559, 15
    %v561 = vxor.u32 %v559, %v560
    %v562 = vmul.u32 %v561, 2221713035
    %v563 = vshrl.u32 %v562, 16
    %v564 = vxor.u32 %v562, %v563
    %v565 = vshrl.u32 %v564, 8
    %v566 = vcvt.s32.f32 %v565
    %v567 = vmul.f32 %v566, 5.9604645e-08
    %v568 = vmax.f32 %v567, 1e-10
    %v569 = vlog2.pop %v568
    %v570 = vmul.f32 %v569, 0.6931472
    %v571 = vsub.f32 0.0, %v570
    %v572 = vlog2.pop %v571
    %v573 = vmul.f32 %v572, 0.6931472
    %v574 = vsub.f32 0.0, %v573
    %v575 = vmul.f32 %v574, %v407
    %v576 = vadd.f32 %v408, %v575
    %577 = vmax.xlane.f32.xlu0 %v576
    %v578 = vpop.xlane.xlu0 %577
    %v579 = vsub.f32 %v576, %v578
    %v580 = vmul.f32 %v579, 1.442695
    %v581 = vpow.pop %v580
    %582 = vadd.xlane.f32.xlu0 %v581
    %v583 = vpop.xlane.xlu0 %582
    %v584 = vrcp.pop %v583
    %v585 = vmul.f32 %v583, %v584
    %v586 = vsub.f32 1.0, %v585
    %v587 = vmul.f32 %v584, %v586
    %v588 = vadd.f32 %v584, %v587
    %vm589 = vweird.f32 %v583
    %vm590 = vweird.f32 %v584
    %vm591 = vmor %vm589, %vm590
    %v592 = vsel %vm591, %v584, %v588
    %v593 = vand.u32 2147483647, %v583
    %vm594 = vcmp.eq.f32.partialorder %v593, 8.507059e+37
    %v595 = vand.u32 %v583, 2147483648
    %v596 = vor.u32 1.1754944e-38, %v595
    %v597 = vsel %vm594, %v596, %v592
    %v598 = vmul.f32 %v581, %v597
    %v599 = vmax.f32 %v554, %v598
    %600 = vst [vmem:[#allocation18] sm:$0xff] %v599
    %v601 = vunpack.c.l.bf16 %v158
    %v602 = vmul.f32 %v601, %v599
    %v603 = vpack.c.bf16 %v602, %v602
    %v604 = vld [vmem:[#allocation15] sm:$0xff]
    %v605 = vld [vmem:[#allocation15 + $0x8] sm:$0xff]
    %v606 = vld [vmem:[#allocation15 + $0x10] sm:$0xff]
    %v607 = vld [vmem:[#allocation15 + $0x18] sm:$0xff]
    %v608 = vld [vmem:[#allocation15 + $0x20] sm:$0xff]
    %v609 = vld [vmem:[#allocation15 + $0x28] sm:$0xff]
    %v610 = vld [vmem:[#allocation15 + $0x30] sm:$0xff]
    %v611 = vld [vmem:[#allocation15 + $0x38] sm:$0xff]
    %v612 = vld [vmem:[#allocation15 + $0x40] sm:$0xff]
    %v613 = vld [vmem:[#allocation15 + $0x48] sm:$0xff]
    %v614 = vld [vmem:[#allocation15 + $0x50] sm:$0xff]
    %v615 = vld [vmem:[#allocation15 + $0x58] sm:$0xff]
    %v616 = vld [vmem:[#allocation15 + $0x60] sm:$0xff]
    %v617 = vld [vmem:[#allocation15 + $0x68] sm:$0xff]
    %v618 = vld [vmem:[#allocation15 + $0x70] sm:$0xff]
    %v619 = vld [vmem:[#allocation15 + $0x78] sm:$0xff]
    %v620 = vld [vmem:[%s10] sm:$0x3]
    %v622 = vperm.slane %v620, 0
    %v623 = vperm.slane %v620, 1
    %v642 = vunpack.c.l.b16 %v604
    %v643 = vunpack.c.h.b16 %v604
    %v644 = vunpack.c.l.b16 %v605
    %v645 = vunpack.c.h.b16 %v605
    %v646 = vunpack.c.l.b16 %v606
    %v647 = vunpack.c.h.b16 %v606
    %v648 = vunpack.c.l.b16 %v607
    %v649 = vunpack.c.h.b16 %v607
    %v650 = vunpack.c.l.b16 %v608
    %v651 = vunpack.c.h.b16 %v608
    %v652 = vunpack.c.l.b16 %v609
    %v653 = vunpack.c.h.b16 %v609
    %v654 = vunpack.c.l.b16 %v610
    %v655 = vunpack.c.h.b16 %v610
    %v656 = vunpack.c.l.b16 %v611
    %v657 = vunpack.c.h.b16 %v611
    %v658 = vunpack.c.l.b16 %v612
    %v659 = vunpack.c.h.b16 %v612
    %v660 = vunpack.c.l.b16 %v613
    %v661 = vunpack.c.h.b16 %v613
    %v662 = vunpack.c.l.b16 %v614
    %v663 = vunpack.c.h.b16 %v614
    %v664 = vunpack.c.l.b16 %v615
    %v665 = vunpack.c.h.b16 %v615
    %v666 = vunpack.c.l.b16 %v616
    %v667 = vunpack.c.h.b16 %v616
    %v668 = vunpack.c.l.b16 %v617
    %v669 = vunpack.c.h.b16 %v617
    %v670 = vunpack.c.l.b16 %v618
    %v671 = vunpack.c.h.b16 %v618
    %v672 = vunpack.c.l.b16 %v619
    %v673 = vunpack.c.h.b16 %v619
    %v674 = vpack.c.b16 %v644, %v642
    %v675 = vpack.c.b16 %v645, %v643
    %v676 = vpack.c.b16 %v648, %v646
    %v677 = vpack.c.b16 %v649, %v647
    %v678 = vpack.c.b16 %v652, %v650
    %v679 = vpack.c.b16 %v653, %v651
    %v680 = vpack.c.b16 %v656, %v654
    %v681 = vpack.c.b16 %v657, %v655
    %v682 = vpack.c.b16 %v660, %v658
    %v683 = vpack.c.b16 %v661, %v659
    %v684 = vpack.c.b16 %v664, %v662
    %v685 = vpack.c.b16 %v665, %v663
    %v686 = vpack.c.b16 %v668, %v666
    %v687 = vpack.c.b16 %v669, %v667
    %v688 = vpack.c.b16 %v672, %v670
    %v689 = vpack.c.b16 %v673, %v671
    %706 = vmatpush.bf16.msra.mxu0 %v688
    %707 = vmatpush.bf16.msra.mxu0 %v686
    %708 = vmatpush.bf16.msra.mxu0 %v684
    %709 = vmatpush.bf16.msra.mxu0 %v682
    %710 = vmatpush.bf16.msra.mxu0 %v680
    %711 = vmatpush.bf16.msra.mxu0 %v678
    %712 = vmatpush.bf16.msra.mxu0 %v676
    %713 = vmatpush.bf16.msra.mxu0 %v674
    %714 = vmatmul.bf16.gmra.mxu0 %v603
    %v715 = vpop.f32.mrf.mxu0
    %v716 = vadd.f32 %v622, %v715
    %v717 = vpop.f32.mrf.mxu0
    %718 = vdwg.mxu0
    %719 = vmatpush.bf16.msra.mxu0 %v689
    %720 = vmatpush.bf16.msra.mxu0 %v687
    %721 = vmatpush.bf16.msra.mxu0 %v685
    %722 = vmatpush.bf16.msra.mxu0 %v683
    %723 = vmatpush.bf16.msra.mxu0 %v681
    %724 = vmatpush.bf16.msra.mxu0 %v679
    %725 = vmatpush.bf16.msra.mxu0 %v677
    %726 = vmatpush.bf16.msra.mxu0 %v675
    %727 = vmatmul.bf16.gmra.mxu0 %v603
    %v728 = vpop.f32.mrf.mxu0
    %v729 = vadd.f32 %v623, %v728
    %v730 = vpop.f32.mrf.mxu0
    %731 = vdwg.mxu0
    %v732 = vmax.f32 %v716, 0.0
    %v733 = vmax.f32 %v729, 0.0
    %v734 = vpack.c.bf16 %v732, %v732
    %v735 = vpack.c.bf16 %v733, %v733
    %v736 = vld [vmem:[#allocation17] sm:$0xff]
    %v737 = vld [vmem:[#allocation17 + $0x8] sm:$0xff]
    %v738 = vld [vmem:[#allocation17 + $0x10] sm:$0xff]
    %v739 = vld [vmem:[#allocation17 + $0x18] sm:$0xff]
    %v740 = vld [vmem:[#allocation17 + $0x20] sm:$0xff]
    %v741 = vld [vmem:[#allocation17 + $0x28] sm:$0xff]
    %v742 = vld [vmem:[#allocation17 + $0x30] sm:$0xff]
    %v743 = vld [vmem:[#allocation17 + $0x38] sm:$0xff]
    %v744 = vld [vmem:[#allocation17 + $0x40] sm:$0xff]
    %v745 = vld [vmem:[#allocation17 + $0x48] sm:$0xff]
    %v746 = vld [vmem:[#allocation17 + $0x50] sm:$0xff]
    %v747 = vld [vmem:[#allocation17 + $0x58] sm:$0xff]
    %v748 = vld [vmem:[#allocation17 + $0x60] sm:$0xff]
    %v749 = vld [vmem:[#allocation17 + $0x68] sm:$0xff]
    %v750 = vld [vmem:[#allocation17 + $0x70] sm:$0xff]
    %v751 = vld [vmem:[#allocation17 + $0x78] sm:$0xff]
    %v752 = vld [vmem:[#allocation17 + $0x80] sm:$0xff]
    %v753 = vld [vmem:[#allocation17 + $0x88] sm:$0xff]
    %v754 = vld [vmem:[#allocation17 + $0x90] sm:$0xff]
    %v755 = vld [vmem:[#allocation17 + $0x98] sm:$0xff]
    %v756 = vld [vmem:[#allocation17 + $0xa0] sm:$0xff]
    %v757 = vld [vmem:[#allocation17 + $0xa8] sm:$0xff]
    %v758 = vld [vmem:[#allocation17 + $0xb0] sm:$0xff]
    %v759 = vld [vmem:[#allocation17 + $0xb8] sm:$0xff]
    %v760 = vld [vmem:[#allocation17 + $0xc0] sm:$0xff]
    %v761 = vld [vmem:[#allocation17 + $0xc8] sm:$0xff]
    %v762 = vld [vmem:[#allocation17 + $0xd0] sm:$0xff]
    %v763 = vld [vmem:[#allocation17 + $0xd8] sm:$0xff]
    %v764 = vld [vmem:[#allocation17 + $0xe0] sm:$0xff]
    %v765 = vld [vmem:[#allocation17 + $0xe8] sm:$0xff]
    %v766 = vld [vmem:[#allocation17 + $0xf0] sm:$0xff]
    %v767 = vld [vmem:[#allocation17 + $0xf8] sm:$0xff]
    %v768 = vld [vmem:[%s12] sm:$0x3]
    %v770 = vperm.slane %v768, 0
    %v771 = vperm.slane %v768, 1
    %v806 = vunpack.c.l.b16 %v736
    %v807 = vunpack.c.h.b16 %v736
    %v808 = vunpack.c.l.b16 %v737
    %v809 = vunpack.c.h.b16 %v737
    %v810 = vunpack.c.l.b16 %v738
    %v811 = vunpack.c.h.b16 %v738
    %v812 = vunpack.c.l.b16 %v739
    %v813 = vunpack.c.h.b16 %v739
    %v814 = vunpack.c.l.b16 %v740
    %v815 = vunpack.c.h.b16 %v740
    %v816 = vunpack.c.l.b16 %v741
    %v817 = vunpack.c.h.b16 %v741
    %v818 = vunpack.c.l.b16 %v742
    %v819 = vunpack.c.h.b16 %v742
    %v820 = vunpack.c.l.b16 %v743
    %v821 = vunpack.c.h.b16 %v743
    %v822 = vunpack.c.l.b16 %v744
    %v823 = vunpack.c.h.b16 %v744
    %v824 = vunpack.c.l.b16 %v745
    %v825 = vunpack.c.h.b16 %v745
    %v826 = vunpack.c.l.b16 %v746
    %v827 = vunpack.c.h.b16 %v746
    %v828 = vunpack.c.l.b16 %v747
    %v829 = vunpack.c.h.b16 %v747
    %v830 = vunpack.c.l.b16 %v748
    %v831 = vunpack.c.h.b16 %v748
    %v832 = vunpack.c.l.b16 %v749
    %v833 = vunpack.c.h.b16 %v749
    %v834 = vunpack.c.l.b16 %v750
    %v835 = vunpack.c.h.b16 %v750
    %v836 = vunpack.c.l.b16 %v751
    %v837 = vunpack.c.h.b16 %v751
    %v838 = vunpack.c.l.b16 %v752
    %v839 = vunpack.c.h.b16 %v752
    %v840 = vunpack.c.l.b16 %v753
    %v841 = vunpack.c.h.b16 %v753
    %v842 = vunpack.c.l.b16 %v754
    %v843 = vunpack.c.h.b16 %v754
    %v844 = vunpack.c.l.b16 %v755
    %v845 = vunpack.c.h.b16 %v755
    %v846 = vunpack.c.l.b16 %v756
    %v847 = vunpack.c.h.b16 %v756
    %v848 = vunpack.c.l.b16 %v757
    %v849 = vunpack.c.h.b16 %v757
    %v850 = vunpack.c.l.b16 %v758
    %v851 = vunpack.c.h.b16 %v758
    %v852 = vunpack.c.l.b16 %v759
    %v853 = vunpack.c.h.b16 %v759
    %v854 = vunpack.c.l.b16 %v760
    %v855 = vunpack.c.h.b16 %v760
    %v856 = vunpack.c.l.b16 %v761
    %v857 = vunpack.c.h.b16 %v761
    %v858 = vunpack.c.l.b16 %v762
    %v859 = vunpack.c.h.b16 %v762
    %v860 = vunpack.c.l.b16 %v763
    %v861 = vunpack.c.h.b16 %v763
    %v862 = vunpack.c.l.b16 %v764
    %v863 = vunpack.c.h.b16 %v764
    %v864 = vunpack.c.l.b16 %v765
    %v865 = vunpack.c.h.b16 %v765
    %v866 = vunpack.c.l.b16 %v766
    %v867 = vunpack.c.h.b16 %v766
    %v868 = vunpack.c.l.b16 %v767
    %v869 = vunpack.c.h.b16 %v767
    %v870 = vpack.c.b16 %v808, %v806
    %v871 = vpack.c.b16 %v809, %v807
    %v872 = vpack.c.b16 %v812, %v810
    %v873 = vpack.c.b16 %v813, %v811
    %v874 = vpack.c.b16 %v816, %v814
    %v875 = vpack.c.b16 %v817, %v815
    %v876 = vpack.c.b16 %v820, %v818
    %v877 = vpack.c.b16 %v821, %v819
    %v878 = vpack.c.b16 %v824, %v822
    %v879 = vpack.c.b16 %v825, %v823
    %v880 = vpack.c.b16 %v828, %v826
    %v881 = vpack.c.b16 %v829, %v827
    %v882 = vpack.c.b16 %v832, %v830
    %v883 = vpack.c.b16 %v833, %v831
    %v884 = vpack.c.b16 %v836, %v834
    %v885 = vpack.c.b16 %v837, %v835
    %v886 = vpack.c.b16 %v840, %v838
    %v887 = vpack.c.b16 %v841, %v839
    %v888 = vpack.c.b16 %v844, %v842
    %v889 = vpack.c.b16 %v845, %v843
    %v890 = vpack.c.b16 %v848, %v846
    %v891 = vpack.c.b16 %v849, %v847
    %v892 = vpack.c.b16 %v852, %v850
    %v893 = vpack.c.b16 %v853, %v851
    %v894 = vpack.c.b16 %v856, %v854
    %v895 = vpack.c.b16 %v857, %v855
    %v896 = vpack.c.b16 %v860, %v858
    %v897 = vpack.c.b16 %v861, %v859
    %v898 = vpack.c.b16 %v864, %v862
    %v899 = vpack.c.b16 %v865, %v863
    %v900 = vpack.c.b16 %v868, %v866
    %v901 = vpack.c.b16 %v869, %v867
    %934 = vmatpush.bf16.msra.mxu0 %v884
    %935 = vmatpush.bf16.msra.mxu0 %v882
    %936 = vmatpush.bf16.msra.mxu0 %v880
    %937 = vmatpush.bf16.msra.mxu0 %v878
    %938 = vmatpush.bf16.msra.mxu0 %v876
    %939 = vmatpush.bf16.msra.mxu0 %v874
    %940 = vmatpush.bf16.msra.mxu0 %v872
    %941 = vmatpush.bf16.msra.mxu0 %v870
    %942 = vmatmul.bf16.gmra.mxu0 %v734
    %v943 = vpop.f32.mrf.mxu0
    %v944 = vadd.f32 %v770, %v943
    %v945 = vpop.f32.mrf.mxu0
    %946 = vdwg.mxu0
    %947 = vmatpush.bf16.msra.mxu0 %v900
    %948 = vmatpush.bf16.msra.mxu0 %v898
    %949 = vmatpush.bf16.msra.mxu0 %v896
    %950 = vmatpush.bf16.msra.mxu0 %v894
    %951 = vmatpush.bf16.msra.mxu0 %v892
    %952 = vmatpush.bf16.msra.mxu0 %v890
    %953 = vmatpush.bf16.msra.mxu0 %v888
    %954 = vmatpush.bf16.msra.mxu0 %v886
    %955 = vmatmul.bf16.gmra.mxu0 %v735
    %v956 = vpop.f32.mrf.mxu0
    %v957 = vadd.f32 %v944, %v956
    %v958 = vpop.f32.mrf.mxu0
    %959 = vdwg.mxu0
    %960 = vmatpush.bf16.msra.mxu0 %v885
    %961 = vmatpush.bf16.msra.mxu0 %v883
    %962 = vmatpush.bf16.msra.mxu0 %v881
    %963 = vmatpush.bf16.msra.mxu0 %v879
    %964 = vmatpush.bf16.msra.mxu0 %v877
    %965 = vmatpush.bf16.msra.mxu0 %v875
    %966 = vmatpush.bf16.msra.mxu0 %v873
    %967 = vmatpush.bf16.msra.mxu0 %v871
    %968 = vmatmul.bf16.gmra.mxu0 %v734
    %v969 = vpop.f32.mrf.mxu0
    %v970 = vadd.f32 %v771, %v969
    %v971 = vpop.f32.mrf.mxu0
    %972 = vdwg.mxu0
    %973 = vmatpush.bf16.msra.mxu0 %v901
    %974 = vmatpush.bf16.msra.mxu0 %v899
    %975 = vmatpush.bf16.msra.mxu0 %v897
    %976 = vmatpush.bf16.msra.mxu0 %v895
    %977 = vmatpush.bf16.msra.mxu0 %v893
    %978 = vmatpush.bf16.msra.mxu0 %v891
    %979 = vmatpush.bf16.msra.mxu0 %v889
    %980 = vmatpush.bf16.msra.mxu0 %v887
    %981 = vmatmul.bf16.gmra.mxu0 %v735
    %v982 = vpop.f32.mrf.mxu0
    %v983 = vadd.f32 %v970, %v982
    %v984 = vpop.f32.mrf.mxu0
    %985 = vdwg.mxu0
    %v986 = vmax.f32 %v957, 0.0
    %v987 = vmax.f32 %v983, 0.0
    %v988 = vld [vmem:[%s13] sm:$0x3]
    %v990 = vperm.slane %v988, 0
    %v991 = vperm.slane %v988, 1
    %v994 = vmul.f32 %v986, %v990
    %v995 = vmul.f32 %v987, %v991
    %v996 = vadd.f32 %v994, %v995
    %997 = vadd.xlane.f32.xlu0 %v996
    %v998 = vpop.xlane.xlu0 %997
    %v999 = vld [vmem:[#allocation5] sm:$0x1]
    %v1001 = vperm.slane %v999, 0
    %v1003 = vadd.f32 %v998, %v1001
    %vm1004 = vcmask 7168
    %1005 = vst.msk [vmem:[%s15] sm:$0xff] %vm1004, %v1003
    // Predicated region
    $region82: #{tpu_custom_call.1} parent=1 // pred_check
      _
    $region83: #{tpu_custom_call.1} parent=1 // pred_check_branch
      %1007 = sbr.rel (0) target = $region85
    $region84: #{tpu_custom_call.1} parent=1 // pred_region
      _
    $region85: #{tpu_custom_call.1} parent=1 // pred_fallthru
      _
    // Predicated region
    $region86: #{tpu_custom_call.1} parent=1 // pred_check
      _
    $region87: #{tpu_custom_call.1} parent=1 // pred_check_branch
      %1009 = sbr.rel (0) target = $region89
    $region88: #{tpu_custom_call.1} parent=1 // pred_region
      %1011 = vsyncadd [#allocation8], 0
      %s1013 = sshll.u32 [#allocation18], 4
      %s1014 = int_to_ptr.vmem [resolvable:$true] %s1013
      %s1015 = sshll.u32 %s16, 4
      %s1016 = int_to_ptr.hbm [resolvable:$true] %s1015
      %1018 = dma.vmem_to_hbm [thread:$0]  %s1014, 128, %s1016, [#allocation8]
    $region89: #{tpu_custom_call.1} parent=1 // pred_fallthru
      _
    // Predicated region
    $region90: #{tpu_custom_call.1} parent=1 // pred_check
      _
    $region91: #{tpu_custom_call.1} parent=1 // pred_check_branch
      %1020 = sbr.rel (0) target = $region93
    $region92: #{tpu_custom_call.1} parent=1 // pred_region
      _
    $region93: #{tpu_custom_call.1} parent=1 // pred_fallthru
      _
    // Predicated region
    $region94: #{tpu_custom_call.1} parent=1 // pred_check
      _
    $region95: #{tpu_custom_call.1} parent=1 // pred_check_branch
      %1022 = sbr.rel (0) target = $region97
    $region96: #{tpu_custom_call.1} parent=1 // pred_region
      %1024 = dma.done [#allocation8], 128
    $region97: #{tpu_custom_call.1} parent=1 // pred_fallthru
      _
    %1025 = vsyncpa [#allocation7], 1
    %1026 = vsyncpa [#allocation10], 1
    %1027 = vsyncpa [#allocation13], 1
    %1028 = vsyncpa [#allocation16], 1
    %1029 = vsyncpa [#allocation8], 1

</llo_original>
